<compile_context>
chip_gen: v5e
topology: v5e:2x2
jax: 0.10.0
libtpu: 0.0.40
codegen_flags: <defaults>
</compile_context>

<pallas_src>
import math
import functools

import jax
import jax.numpy as jnp
import numpy as np
from jax import lax
from jax.experimental import pallas as pl
from jax.experimental.pallas import tpu as pltpu


MXU_DT = jnp.bfloat16            # MXU operand dtype (f32 accumulation everywhere)
NEG_INF = -1e30                  # finite mask sentinel (NaN-safe under chunking)
Q_TILE = 256                     # query tile for the flash loop
KV_CHUNK = 256                   # KV tile length for the online-softmax loop
FF_TILE = 2048                   # F chunk bounding the f32 FFN hidden temporary
MAX_VOCAB_TILE = 2048            # vocab tile for the final projection
MAX_ROW_TILE = 512               # row tile for the final projection


def _round_up(x, m):
    return ((x + m - 1) // m) * m


def _vmem_limit_bytes():
    """Per-generation VMEM budget: 85% of reported capacity, clamped."""
    try:
        cap = int(pltpu.get_tpu_info().vmem_capacity_bytes)
        return min(112 * 1024 * 1024, max(32 * 1024 * 1024, int(cap * 0.85)))
    except Exception:
        return 48 * 1024 * 1024


def _num_batch_tiles(B):
    """2 batch tiles only on 2-TC (v7x-like) parts; single tile otherwise so the
    layer-weight stream is DMA'd from HBM exactly once per forward."""
    if B % 2 != 0:
        return 1
    try:
        if 'v7' in jax.devices()[0].device_kind.lower():
            return 2
    except Exception:
        pass
    return 1


# ----------------------------------------------------------------------------
# Shared math helpers
# ----------------------------------------------------------------------------

def _layernorm(v, gamma, beta, eps=1e-5):
    mu = jnp.mean(v, axis=-1, keepdims=True)
    var = jnp.mean((v - mu) ** 2, axis=-1, keepdims=True)
    return (v - mu) * lax.rsqrt(var + eps) * gamma + beta


def _causal_attention(q, k, v):
    """Flash-style causal attention, batched over G = heads * batch.

    q, k: (G, T, dk) bf16 (1/sqrt(dk) already folded into q); v: (G, T, dv) bf16.
    Q is tiled; KV chunks entirely above the causal diagonal are skipped and
    only the diagonal chunk applies the iota mask, so ~half of the score-matmul
    and exp() work of the dense version is avoided.  Every query row sees key 0
    in its first chunk, so the -1e30 sentinel never leaves m at -inf (NaN-safe).
    """
    G, T, _ = q.shape
    dv = v.shape[-1]
    q_tile = min(T, Q_TILE)
    kv_chunk = min(T, KV_CHUNK)

    outs = []
    for q0 in range(0, T, q_tile):                    # static unroll over Q tiles
        qt = min(q_tile, T - q0)
        qb = q[:, q0:q0 + qt, :]
        m = jnp.full((G, qt, 1), NEG_INF, jnp.float32)
        lsum = jnp.zeros((G, qt, 1), jnp.float32)
        acc = jnp.zeros((G, qt, dv), jnp.float32)
        kv_hi = q0 + qt                               # causal bound for this tile
        for k0 in range(0, kv_hi, kv_chunk):          # fully-masked chunks skipped
            cur = min(kv_chunk, kv_hi - k0)
            kc = k[:, k0:k0 + cur, :]
            vc = v[:, k0:k0 + cur, :]
            s = jnp.einsum('gqe,gke->gqk', qb, kc,
                           preferred_element_type=jnp.float32)
            if k0 + cur - 1 > q0:                     # mask only the diagonal chunk
                rows = lax.broadcasted_iota(jnp.int32, (qt, cur), 0) + q0
                cols = lax.broadcasted_iota(jnp.int32, (qt, cur), 1) + k0
                s = jnp.where((rows >= cols)[None], s, NEG_INF)
            m_new = jnp.maximum(m, jnp.max(s, axis=-1, keepdims=True))
            alpha = jnp.exp(m - m_new)
            p = jnp.exp(s - m_new)
            lsum = alpha * lsum + jnp.sum(p, axis=-1, keepdims=True)
            acc = alpha * acc + jnp.einsum('gqk,gke->gqe', p.astype(MXU_DT), vc,
                                           preferred_element_type=jnp.float32)
            m = m_new
        outs.append(acc * pl.reciprocal(lsum, approx=True))
    # TODO(synk): for very long T convert the KV-chunk unroll into lax.fori_loop
    # to bound code size / live ranges.
    return outs[0] if len(outs) == 1 else jnp.concatenate(outs, axis=1)


# ----------------------------------------------------------------------------
# Pallas kernels
# ----------------------------------------------------------------------------

def block_kernel(x_ref,
                 ln1_g_ref, ln1_b_ref,
                 wqkv_ref, bqkv_ref, wo_ref,
                 ln2_g_ref, ln2_b_ref,
                 w1_ref, b1_ref, w2_ref, b2_ref,
                 out_ref, *, h, dk, dv):
    """Grid = (batch_tiles, layers).  Runs one Block for one batch tile.

    The residual activation lives in out_ref, whose block index only depends on
    the batch tile, so it stays resident in VMEM across the layer axis.
    """
    layer = pl.program_id(1)

    @pl.when(layer == 0)
    def _():
        out_ref[...] = x_ref[...]                 # load embeddings once per batch tile

    x = out_ref[...]                              # (bt, T, D) f32, resident
    bt, T, D = x.shape
    R = bt * T

    # --- LayerNorm 1 (f32) ---
    xn = _layernorm(x, ln1_g_ref[...], ln1_b_ref[...])
    xn_flat = xn.reshape(R, D).astype(MXU_DT)     # flat rows -> big MXU M tile

    # --- fused QKV projection: one lane-dense (D, h*(2dk+dv)) matmul ---
    qkv = jnp.dot(xn_flat, wqkv_ref[0], preferred_element_type=jnp.float32)
    qkv = (qkv + bqkv_ref[0]).astype(MXU_DT)      # bf16 right away (halves VMEM)
    qkv = qkv.reshape(bt, T, -1)

    # --- regroup heads into one leading batch axis G = h*bt (data movement
    #     only; the flash loop below is traced ONCE for all heads) ---
    q_off, k_off, v_off = 0, h * dk, 2 * h * dk
    q = jnp.stack([qkv[:, :, q_off + i * dk:q_off + (i + 1) * dk]
                   for i in range(h)], axis=0).reshape(h * bt, T, dk)
    k = jnp.stack([qkv[:, :, k_off + i * dk:k_off + (i + 1) * dk]
                   for i in range(h)], axis=0).reshape(h * bt, T, dk)
    v = jnp.stack([qkv[:, :, v_off + i * dv:v_off + (i + 1) * dv]
                   for i in range(h)], axis=0).reshape(h * bt, T, dv)

    o = _causal_attention(q, k, v)                # (h*bt, T, dv) f32

    # --- concat heads on the lane axis, single W_O matmul (K = h*dv) ---
    o = o.reshape(h, bt, T, dv)
    o_cat = jnp.concatenate([o[i] for i in range(h)], axis=-1)   # (bt, T, h*dv)
    attn = jnp.dot(o_cat.reshape(R, h * dv).astype(MXU_DT), wo_ref[0],
                   preferred_element_type=jnp.float32)           # (R, D)

    x = x + attn.reshape(bt, T, D)                # residual 1

    # --- LayerNorm 2 + FeedForward (hidden chunked over F) ---
    xn2 = _layernorm(x, ln2_g_ref[...], ln2_b_ref[...])
    xn2_flat = xn2.reshape(R, D).astype(MXU_DT)
    F = w1_ref.shape[2]
    ft = min(F, FF_TILE)
    ff = jnp.zeros((R, D), jnp.float32)
    for f0 in range(0, F, ft):
        cur = min(ft, F - f0)
        hid = (jnp.dot(xn2_flat, w1_ref[0, :, f0:f0 + cur],
                       preferred_element_type=jnp.float32)
               + b1_ref[0, :, f0:f0 + cur])
        hid = jnp.maximum(hid, 0.0).astype(MXU_DT)          # ReLU
        ff = ff + jnp.dot(hid, w2_ref[0, f0:f0 + cur, :],
                          preferred_element_type=jnp.float32)
    ff = ff + b2_ref[0]

    out_ref[...] = x + ff.reshape(bt, T, D)       # residual 2, stays resident


def final_kernel(x_ref, lnf_g_ref, lnf_b_ref, wout_ref, bout_ref,
                 logits_ref, xn_ref):
    """Final LayerNorm + vocab projection.  Grid = (row_tiles, vocab_tiles).

    The LayerNorm + bf16 cast is computed ONCE per row tile (vocab tile 0) into
    a VMEM scratch and reused for every vocab tile.
    """
    @pl.when(pl.program_id(1) == 0)
    def _():
        xn = _layernorm(x_ref[...], lnf_g_ref[...], lnf_b_ref[...])
        xn_ref[...] = xn.astype(MXU_DT)

    logits_ref[...] = (jnp.dot(xn_ref[...], wout_ref[...],
                               preferred_element_type=jnp.float32)
                       + bout_ref[...])


# ----------------------------------------------------------------------------
# pallas_call wrappers
# ----------------------------------------------------------------------------

def _pick_row_tile(R, max_tile=MAX_ROW_TILE):
    if R <= max_tile:
        return R
    for t in range(max_tile, 7, -8):
        if R % t == 0:
            return t
    return R


def run_blocks(x, sp, *, h, dk, dv):
    """All transformer blocks in a single pallas_call with layer-streamed weights."""
    B, T, D = x.shape
    L, _, P = sp['wqkv'].shape
    F = sp['w1'].shape[2]

    nb = _num_batch_tiles(B)
    bt = B // nb

    kernel = functools.partial(block_kernel, h=h, dk=dk, dv=dv)

    return pl.pallas_call(
        kernel,
        out_shape=jax.ShapeDtypeStruct((B, T, D), jnp.float32),
        grid=(nb, L),
        in_specs=[
            pl.BlockSpec((bt, T, D), lambda b, l: (b, 0, 0)),           # embeddings
            pl.BlockSpec((1, 1, D), lambda b, l: (l, 0, 0)),            # ln1 gamma
            pl.BlockSpec((1, 1, D), lambda b, l: (l, 0, 0)),            # ln1 beta
            pl.BlockSpec((1, D, P), lambda b, l: (l, 0, 0)),            # fused W_qkv
            pl.BlockSpec((1, 1, P), lambda b, l: (l, 0, 0)),            # fused b_qkv
            pl.BlockSpec((1, h * dv, D), lambda b, l: (l, 0, 0)),       # W_O
            pl.BlockSpec((1, 1, D), lambda b, l: (l, 0, 0)),            # ln2 gamma
            pl.BlockSpec((1, 1, D), lambda b, l: (l, 0, 0)),            # ln2 beta
            pl.BlockSpec((1, D, F), lambda b, l: (l, 0, 0)),            # FF W1
            pl.BlockSpec((1, 1, F), lambda b, l: (l, 0, 0)),            # FF b1
            pl.BlockSpec((1, F, D), lambda b, l: (l, 0, 0)),            # FF W2
            pl.BlockSpec((1, 1, D), lambda b, l: (l, 0, 0)),            # FF b2
        ],
        out_specs=pl.BlockSpec((bt, T, D), lambda b, l: (b, 0, 0)),     # resident over l
        compiler_params=pltpu.CompilerParams(
            dimension_semantics=("parallel", "arbitrary"),
            vmem_limit_bytes=_vmem_limit_bytes()),
    )(x,
      sp['ln1_g'], sp['ln1_b'],
      sp['wqkv'], sp['bqkv'], sp['wo'],
      sp['ln2_g'], sp['ln2_b'],
      sp['w1'], sp['b1'], sp['w2'], sp['b2'])


def run_final(x2d, sp):
    """Final LayerNorm + output projection, tiled over rows and (padded) vocab."""
    R, D = x2d.shape
    V_pad = sp['wout'].shape[1]
    tv = min(MAX_VOCAB_TILE, V_pad)
    nv = V_pad // tv
    tr = _pick_row_tile(R)
    nr = R // tr

    return pl.pallas_call(
        final_kernel,
        out_shape=jax.ShapeDtypeStruct((R, V_pad), jnp.float32),
        grid=(nr, nv),
        in_specs=[
            pl.BlockSpec((tr, D), lambda r, j: (r, 0)),      # activation row tile
            pl.BlockSpec((1, D), lambda r, j: (0, 0)),       # lnf gamma
            pl.BlockSpec((1, D), lambda r, j: (0, 0)),       # lnf beta
            pl.BlockSpec((D, tv), lambda r, j: (0, j)),      # W_out vocab tile
            pl.BlockSpec((1, tv), lambda r, j: (0, j)),      # b_out vocab tile
        ],
        out_specs=pl.BlockSpec((tr, tv), lambda r, j: (r, j)),
        scratch_shapes=[pltpu.VMEM((tr, D), MXU_DT)],        # normalized rows (hoisted LN)
        compiler_params=pltpu.CompilerParams(
            dimension_semantics=("parallel", "arbitrary"),
            vmem_limit_bytes=_vmem_limit_bytes()),
    )(x2d, sp['lnf_g'], sp['lnf_b'], sp['wout'], sp['bout'])


def make_forward(cfg):
    h, dk, dv = cfg['h'], cfg['dim_k'], cfg['dim_v']
    V = cfg['token_dim']

    @jax.jit
    def forward(tokens, stacked):
        """LanguageModel.forward (targets=None path): returns logits (B, T, V)."""
        B, T = tokens.shape
        # Embedding lookups (gather) stay in plain JAX (glue around the kernels).
        x = jnp.take(stacked['tok_emb'], tokens, axis=0)          # (B, T, D)
        x = x + stacked['pos_emb'][:T][None, :, :]
        x = run_blocks(x, stacked, h=h, dk=dk, dv=dv)
        logits = run_final(x.reshape(B * T, -1), stacked)         # (B*T, V_pad)
        return logits[:, :V].reshape(B, T, V)

    return forward


# ----------------------------------------------------------------------------
# Parameter construction (PyTorch-style shapes) and kernel-layout stacking
# ----------------------------------------------------------------------------

def init_params(key, cfg):
    D, V, F = cfg['model_dim'], cfg['token_dim'], cfg['dim_ff']
    dk, dv, h = cfg['dim_k'], cfg['dim_v'], cfg['h']
    L, nblk = cfg['context_length'], cfg['transformer_blocks']

    def uni(k, shape, fan_in):
        bound = 1.0 / math.sqrt(fan_in)
        return jax.random.uniform(k, shape, jnp.float32, -bound, bound)

    keys = jax.random.split(key, 2 + nblk + 1)
    params = {
        'tok_emb': jax.random.normal(keys[0], (V, D), jnp.float32),
        'pos_emb': jax.random.normal(keys[1], (L, D), jnp.float32),
    }
    blocks = []
    for b in range(nblk):
        ks = jax.random.split(keys[2 + b], 12)
        blocks.append({
            'ln1_g': jnp.ones((D,), jnp.float32), 'ln1_b': jnp.zeros((D,), jnp.float32),
            'wq': uni(ks[0], (h, D, dk), D), 'bq': uni(ks[1], (h, dk), D),
            'wk': uni(ks[2], (h, D, dk), D), 'bk': uni(ks[3], (h, dk), D),
            'wv': uni(ks[4], (h, D, dv), D), 'bv': uni(ks[5], (h, dv), D),
            'wo': uni(ks[6], (h * dv, D), h * dv),          # Linear(h*dv -> D), bias=False
            'ln2_g': jnp.ones((D,), jnp.float32), 'ln2_b': jnp.zeros((D,), jnp.float32),
            'w1': uni(ks[7], (D, F), D), 'b1': uni(ks[8], (F,), D),
            'w2': uni(ks[9], (F, D), F), 'b2': uni(ks[10], (D,), F),
        })
    params['blocks'] = blocks

    kf = jax.random.split(keys[-1], 2)
    params['lnf_g'] = jnp.ones((D,), jnp.float32)
    params['lnf_b'] = jnp.zeros((D,), jnp.float32)
    params['wout'] = uni(kf[0], (D, V), D)
    params['bout'] = uni(kf[1], (V,), D)
    return params


def stack_params(params, cfg):
    """One-time host-side restructuring into the kernel's streaming layout.

    * QKV weights fused head-major into (L, D, h*(2dk+dv)), 1/sqrt(dk) folded in.
    * W_O kept as (L, h*dv, D) for a single fused output contraction.
    * Output vocab padded to a multiple of 128 for lane-dense, evenly tiled logits.
    * Matmul weights cast to bf16 (f32 accumulation in-kernel); LN/bias stay f32.
    """
    h, dk, dv = cfg['h'], cfg['dim_k'], cfg['dim_v']
    D, V = cfg['model_dim'], cfg['token_dim']
    scale = 1.0 / math.sqrt(dk)

    def head_cols(w):                       # (h, D, e) -> (D, h*e), head-major columns
        return jnp.transpose(w, (1, 0, 2)).reshape(D, -1)

    wqkv, bqkv, wo = [], [], []
    ln1_g, ln1_b, ln2_g, ln2_b = [], [], [], []
    w1, b1, w2, b2 = [], [], [], []
    for blk in params['blocks']:
        wqkv.append(jnp.concatenate(
            [head_cols(blk['wq'] * scale), head_cols(blk['wk']), head_cols(blk['wv'])],
            axis=-1))
        bqkv.append(jnp.concatenate(
            [(blk['bq'] * scale).reshape(-1), blk['bk'].reshape(-1), blk['bv'].reshape(-1)]))
        wo.append(blk['wo'])                                   # (h*dv, D)
        ln1_g.append(blk['ln1_g']); ln1_b.append(blk['ln1_b'])
        ln2_g.append(blk['ln2_g']); ln2_b.append(blk['ln2_b'])
        w1.append(blk['w1']); b1.append(blk['b1'])
        w2.append(blk['w2']); b2.append(blk['b2'])

    # Vocab padding: pad V up to a multiple of the vocab tile so the final grid
    # divides evenly and logits stores stay lane-dense.
    tv = min(MAX_VOCAB_TILE, _round_up(V, 128))
    V_pad = _round_up(V, tv)
    wout = params['wout']
    bout = params['bout']
    if V_pad > V:
        wout = jnp.pad(wout, ((0, 0), (0, V_pad - V)))
        bout = jnp.pad(bout, ((0, V_pad - V),))

    stacked = {
        'tok_emb': params['tok_emb'],
        'pos_emb': params['pos_emb'],
        'wqkv': jnp.stack(wqkv).astype(MXU_DT),              # (L, D, P)
        'bqkv': jnp.stack(bqkv)[:, None, :],                 # (L, 1, P) f32
        'wo': jnp.stack(wo).astype(MXU_DT),                  # (L, h*dv, D)
        'ln1_g': jnp.stack(ln1_g)[:, None, :], 'ln1_b': jnp.stack(ln1_b)[:, None, :],
        'ln2_g': jnp.stack(ln2_g)[:, None, :], 'ln2_b': jnp.stack(ln2_b)[:, None, :],
        'w1': jnp.stack(w1).astype(MXU_DT),                  # (L, D, F)
        'b1': jnp.stack(b1)[:, None, :],                     # (L, 1, F)
        'w2': jnp.stack(w2).astype(MXU_DT),                  # (L, F, D)
        'b2': jnp.stack(b2)[:, None, :],                     # (L, 1, D)
        'lnf_g': params['lnf_g'][None, :],                   # (1, D)
        'lnf_b': params['lnf_b'][None, :],
        'wout': wout.astype(MXU_DT),                         # (D, V_pad)
        'bout': bout[None, :],                               # (1, V_pad) f32
    }
    return stacked


# ----------------------------------------------------------------------------
# Pure-JAX f32 reference (mirrors the PyTorch module exactly)
# ----------------------------------------------------------------------------

def reference_forward(tokens, params, cfg):
    h, dk = cfg['h'], cfg['dim_k']
    T = tokens.shape[1]
    x = jnp.take(params['tok_emb'], tokens, axis=0) + params['pos_emb'][:T][None]
    causal = jnp.tril(jnp.ones((T, T), bool))
    for blk in params['blocks']:
        xn = _layernorm(x, blk['ln1_g'], blk['ln1_b'])
        heads = []
        for i in range(h):
            q = xn @ blk['wq'][i] + blk['bq'][i]
            k = xn @ blk['wk'][i] + blk['bk'][i]
            v = xn @ blk['wv'][i] + blk['bv'][i]
            s = jnp.einsum('bqe,bke->bqk', q, k) / math.sqrt(dk)
            s = jnp.where(causal[None], s, -jnp.inf)
            heads.append(jax.nn.softmax(s, axis=-1) @ v)
        x = x + jnp.concatenate(heads, -1) @ blk['wo']
        xn2 = _layernorm(x, blk['ln2_g'], blk['ln2_b'])
        x = x + (jnp.maximum(xn2 @ blk['w1'] + blk['b1'], 0.0) @ blk['w2'] + blk['b2'])
    xn = _layernorm(x, params['lnf_g'], params['lnf_b'])
    return xn @ params['wout'] + params['bout']


# ----------------------------------------------------------------------------
# Main
# ----------------------------------------------------------------------------

if __name__ == "__main__":
    cfg = dict(
        token_dim=64,           # vocabulary size
        model_dim=32,
        dim_ff=64,
        dim_k=16,
        dim_v=16,
        h=2,
        context_length=8,
        transformer_blocks=2,
        dropout=0.0,
    )

    key = jax.random.PRNGKey(0)
    k_param, k_tok = jax.random.split(key)
    params = init_params(k_param, cfg)
    stacked = stack_params(params, cfg)          # one-time layout restructuring

    B, T = 2, cfg['context_length']
    tokens = jax.random.randint(k_tok, (B, T), 0, cfg['token_dim'], dtype=jnp.int32)

    forward = make_forward(cfg)
    logits = jax.block_until_ready(forward(tokens, stacked))

    assert logits.shape == (B, T, cfg['token_dim'])
    ref = reference_forward(tokens, params, cfg)
    # bf16 MXU operands + approx reciprocal => compare against f32 reference with
    # a correspondingly relaxed tolerance.
    np.testing.assert_allclose(np.asarray(logits), np.asarray(ref), rtol=5e-2, atol=5e-2)

    print("KERNEL_OK")
</pallas_src>

<mosaic_0001>
module attributes {stable_mosaic.version = 11 : i64} {
  func.func @final_kernel(%arg0: i32, %arg1: i32, %arg2: memref<16x32xf32, #tpu.memory_space<vmem>>, %arg3: memref<1x32xf32, #tpu.memory_space<vmem>>, %arg4: memref<1x32xf32, #tpu.memory_space<vmem>>, %arg5: memref<32x128xbf16, #tpu.memory_space<vmem>>, %arg6: memref<1x128xf32, #tpu.memory_space<vmem>>, %arg7: memref<16x128xf32, #tpu.memory_space<vmem>>, %arg8: memref<16x32xbf16, #tpu.memory_space<vmem>>) attributes {dimension_semantics = [#tpu.dimension_semantics<parallel>, #tpu.dimension_semantics<arbitrary>], iteration_bounds = array<i64: 1, 1>, scalar_prefetch = 0 : i64, scratch_operands = 1 : i64, tpu.core_type = #tpu.core_type<tc>, window_params = [{transform_indices = @transform_0, window_bounds = array<i64: 16, 32>}, {pipeline_mode = #tpu.pipeline_mode<synchronous>, transform_indices = @transform_1, window_bounds = array<i64: 1, 32>}, {pipeline_mode = #tpu.pipeline_mode<synchronous>, transform_indices = @transform_2, window_bounds = array<i64: 1, 32>}, {transform_indices = @transform_3, window_bounds = array<i64: 32, 128>}, {transform_indices = @transform_4, window_bounds = array<i64: 1, 128>}, {transform_indices = @transform_5, window_bounds = array<i64: 16, 128>}]} {
    %c0_i32 = arith.constant 0 : i32
    %0 = arith.cmpi eq, %arg1, %c0_i32 : i32
    %1 = arith.extui %0 : i1 to i32
    %c0_i32_0 = arith.constant 0 : i32
    %2 = arith.cmpi ne, %1, %c0_i32_0 : i32
    scf.if %2 {
      %c0_8 = arith.constant 0 : index
      %c0_9 = arith.constant 0 : index
      %10 = vector.load %arg2[%c0_8, %c0_9] : memref<16x32xf32, #tpu.memory_space<vmem>>, vector<16x32xf32>
      %c0_10 = arith.constant 0 : index
      %c0_11 = arith.constant 0 : index
      %11 = vector.load %arg3[%c0_10, %c0_11] : memref<1x32xf32, #tpu.memory_space<vmem>>, vector<1x32xf32>
      %c0_12 = arith.constant 0 : index
      %c0_13 = arith.constant 0 : index
      %12 = vector.load %arg4[%c0_12, %c0_13] : memref<1x32xf32, #tpu.memory_space<vmem>>, vector<1x32xf32>
      %cst_14 = arith.constant dense<0.000000e+00> : vector<16xf32>
      %13 = vector.multi_reduction <add>, %10, %cst_14 [1] : vector<16x32xf32> to vector<16xf32>
      %14 = vector.shape_cast %13 : vector<16xf32> to vector<16x1xf32>
      %cst_15 = arith.constant 3.200000e+01 : f32
      %15 = vector.broadcast %cst_15 : f32 to vector<16x1xf32>
      %16 = arith.divf %14, %15 : vector<16x1xf32>
      %17 = vector.broadcast %16 : vector<16x1xf32> to vector<16x32xf32>
      %18 = arith.subf %10, %17 : vector<16x32xf32>
      %19 = arith.mulf %18, %18 : vector<16x32xf32>
      %cst_16 = arith.constant dense<0.000000e+00> : vector<16xf32>
      %20 = vector.multi_reduction <add>, %19, %cst_16 [1] : vector<16x32xf32> to vector<16xf32>
      %21 = vector.shape_cast %20 : vector<16xf32> to vector<16x1xf32>
      %cst_17 = arith.constant 3.200000e+01 : f32
      %22 = vector.broadcast %cst_17 : f32 to vector<16x1xf32>
      %23 = arith.divf %21, %22 : vector<16x1xf32>
      %24 = vector.broadcast %16 : vector<16x1xf32> to vector<16x32xf32>
      %25 = arith.subf %10, %24 : vector<16x32xf32>
      %cst_18 = arith.constant 9.99999974E-6 : f32
      %26 = vector.broadcast %cst_18 : f32 to vector<16x1xf32>
      %27 = arith.addf %23, %26 : vector<16x1xf32>
      %28 = math.rsqrt %27 : vector<16x1xf32>
      %29 = vector.broadcast %28 : vector<16x1xf32> to vector<16x32xf32>
      %30 = arith.mulf %25, %29 : vector<16x32xf32>
      %31 = vector.broadcast %11 : vector<1x32xf32> to vector<16x32xf32>
      %32 = arith.mulf %30, %31 : vector<16x32xf32>
      %33 = vector.broadcast %12 : vector<1x32xf32> to vector<16x32xf32>
      %34 = arith.addf %32, %33 : vector<16x32xf32>
      %35 = arith.truncf %34 : vector<16x32xf32> to vector<16x32xbf16>
      %c0_19 = arith.constant 0 : index
      %c0_20 = arith.constant 0 : index
      %36 = vector.load %arg8[%c0_19, %c0_20] : memref<16x32xbf16, #tpu.memory_space<vmem>>, vector<16x32xbf16>
      tpu.vector_store %arg8[%c0_19, %c0_20], %35 {strides = array<i32>} : memref<16x32xbf16, #tpu.memory_space<vmem>>, vector<16x32xbf16>,
    } else {
    }
    %c0 = arith.constant 0 : index
    %c0_1 = arith.constant 0 : index
    %3 = vector.load %arg8[%c0, %c0_1] : memref<16x32xbf16, #tpu.memory_space<vmem>>, vector<16x32xbf16>
    %c0_2 = arith.constant 0 : index
    %c0_3 = arith.constant 0 : index
    %4 = vector.load %arg5[%c0_2, %c0_3] : memref<32x128xbf16, #tpu.memory_space<vmem>>, vector<32x128xbf16>
    %cst = arith.constant dense<0.000000e+00> : vector<16x128xf32>
    %5 = tpu.matmul %3, %4, %cst {dimension_numbers = #tpu.dot_dimension_numbers<[1], [0], [0], [1], [0, 0, 1, 1], [], []>} : vector<16x32xbf16>, vector<32x128xbf16>, vector<16x128xf32> -> vector<16x128xf32>
    %c0_4 = arith.constant 0 : index
    %c0_5 = arith.constant 0 : index
    %6 = vector.load %arg6[%c0_4, %c0_5] : memref<1x128xf32, #tpu.memory_space<vmem>>, vector<1x128xf32>
    %7 = vector.broadcast %6 : vector<1x128xf32> to vector<16x128xf32>
    %8 = arith.addf %5, %7 : vector<16x128xf32>
    %c0_6 = arith.constant 0 : index
    %c0_7 = arith.constant 0 : index
    %9 = vector.load %arg7[%c0_6, %c0_7] : memref<16x128xf32, #tpu.memory_space<vmem>>, vector<16x128xf32>
    tpu.vector_store %arg7[%c0_6, %c0_7], %8 {strides = array<i32>} : memref<16x128xf32, #tpu.memory_space<vmem>>, vector<16x128xf32>,
    return
  }
  func.func @transform_0(%arg0: i32, %arg1: i32) -> (i32, i32) {
    %c0_i32 = arith.constant 0 : i32
    %c0_i32_0 = arith.constant 0 : i32
    return %arg0, %c0_i32 : i32, i32
  }
  func.func @transform_1(%arg0: i32, %arg1: i32) -> (i32, i32) {
    %c0_i32 = arith.constant 0 : i32
    %c0_i32_0 = arith.constant 0 : i32
    %c0_i32_1 = arith.constant 0 : i32
    return %c0_i32, %c0_i32_0 : i32, i32
  }
  func.func @transform_2(%arg0: i32, %arg1: i32) -> (i32, i32) {
    %c0_i32 = arith.constant 0 : i32
    %c0_i32_0 = arith.constant 0 : i32
    %c0_i32_1 = arith.constant 0 : i32
    return %c0_i32, %c0_i32_0 : i32, i32
  }
  func.func @transform_3(%arg0: i32, %arg1: i32) -> (i32, i32) {
    %c0_i32 = arith.constant 0 : i32
    %c0_i32_0 = arith.constant 0 : i32
    return %c0_i32, %arg1 : i32, i32
  }
  func.func @transform_4(%arg0: i32, %arg1: i32) -> (i32, i32) {
    %c0_i32 = arith.constant 0 : i32
    %c0_i32_0 = arith.constant 0 : i32
    return %c0_i32, %arg1 : i32, i32
  }
  func.func @transform_5(%arg0: i32, %arg1: i32) -> (i32, i32) {
    %c0_i32 = arith.constant 0 : i32
    return %arg0, %arg1 : i32, i32
  }
}

module attributes {stable_mosaic.version = 11 : i64} {
  func.func @block_kernel(%arg0: i32, %arg1: i32, %arg2: memref<2x8x32xf32, #tpu.memory_space<vmem>>, %arg3: memref<1x1x32xf32, #tpu.memory_space<vmem>>, %arg4: memref<1x1x32xf32, #tpu.memory_space<vmem>>, %arg5: memref<1x32x96xbf16, #tpu.memory_space<vmem>>, %arg6: memref<1x1x96xf32, #tpu.memory_space<vmem>>, %arg7: memref<1x32x32xbf16, #tpu.memory_space<vmem>>, %arg8: memref<1x1x32xf32, #tpu.memory_space<vmem>>, %arg9: memref<1x1x32xf32, #tpu.memory_space<vmem>>, %arg10: memref<1x32x64xbf16, #tpu.memory_space<vmem>>, %arg11: memref<1x1x64xf32, #tpu.memory_space<vmem>>, %arg12: memref<1x64x32xbf16, #tpu.memory_space<vmem>>, %arg13: memref<1x1x32xf32, #tpu.memory_space<vmem>>, %arg14: memref<2x8x32xf32, #tpu.memory_space<vmem>>) attributes {dimension_semantics = [#tpu.dimension_semantics<parallel>, #tpu.dimension_semantics<arbitrary>], iteration_bounds = array<i64: 1, 2>, scalar_prefetch = 0 : i64, scratch_operands = 0 : i64, tpu.core_type = #tpu.core_type<tc>, window_params = [{transform_indices = @transform_0, window_bounds = array<i64: 2, 8, 32>}, {transform_indices = @transform_1, window_bounds = array<i64: 1, 1, 32>}, {transform_indices = @transform_2, window_bounds = array<i64: 1, 1, 32>}, {transform_indices = @transform_3, window_bounds = array<i64: 1, 32, 96>}, {transform_indices = @transform_4, window_bounds = array<i64: 1, 1, 96>}, {transform_indices = @transform_5, window_bounds = array<i64: 1, 32, 32>}, {transform_indices = @transform_6, window_bounds = array<i64: 1, 1, 32>}, {transform_indices = @transform_7, window_bounds = array<i64: 1, 1, 32>}, {transform_indices = @transform_8, window_bounds = array<i64: 1, 32, 64>}, {transform_indices = @transform_9, window_bounds = array<i64: 1, 1, 64>}, {transform_indices = @transform_10, window_bounds = array<i64: 1, 64, 32>}, {transform_indices = @transform_11, window_bounds = array<i64: 1, 1, 32>}, {transform_indices = @transform_12, window_bounds = array<i64: 2, 8, 32>}]} {
    %c0_i32 = arith.constant 0 : i32
    %0 = arith.cmpi eq, %arg1, %c0_i32 : i32
    %1 = arith.extui %0 : i1 to i32
    %c0_i32_0 = arith.constant 0 : i32
    %2 = arith.cmpi ne, %1, %c0_i32_0 : i32
    scf.if %2 {
      %c0_64 = arith.constant 0 : index
      %c0_65 = arith.constant 0 : index
      %c0_66 = arith.constant 0 : index
      %154 = vector.load %arg2[%c0_64, %c0_65, %c0_66] : memref<2x8x32xf32, #tpu.memory_space<vmem>>, vector<2x8x32xf32>
      %c0_67 = arith.constant 0 : index
      %c0_68 = arith.constant 0 : index
      %c0_69 = arith.constant 0 : index
      %155 = vector.load %arg14[%c0_67, %c0_68, %c0_69] : memref<2x8x32xf32, #tpu.memory_space<vmem>>, vector<2x8x32xf32>
      tpu.vector_store %arg14[%c0_67, %c0_68, %c0_69], %154 {strides = array<i32>} : memref<2x8x32xf32, #tpu.memory_space<vmem>>, vector<2x8x32xf32>,
    } else {
    }
    %c0 = arith.constant 0 : index
    %c0_1 = arith.constant 0 : index
    %c0_2 = arith.constant 0 : index
    %3 = vector.load %arg14[%c0, %c0_1, %c0_2] : memref<2x8x32xf32, #tpu.memory_space<vmem>>, vector<2x8x32xf32>
    %c0_3 = arith.constant 0 : index
    %c0_4 = arith.constant 0 : index
    %c0_5 = arith.constant 0 : index
    %4 = vector.load %arg3[%c0_3, %c0_4, %c0_5] : memref<1x1x32xf32, #tpu.memory_space<vmem>>, vector<1x1x32xf32>
    %c0_6 = arith.constant 0 : index
    %c0_7 = arith.constant 0 : index
    %c0_8 = arith.constant 0 : index
    %5 = vector.load %arg4[%c0_6, %c0_7, %c0_8] : memref<1x1x32xf32, #tpu.memory_space<vmem>>, vector<1x1x32xf32>
    %cst = arith.constant dense<0.000000e+00> : vector<2x8xf32>
    %6 = vector.multi_reduction <add>, %3, %cst [2] : vector<2x8x32xf32> to vector<2x8xf32>
    %7 = vector.shape_cast %6 : vector<2x8xf32> to vector<2x8x1xf32>
    %cst_9 = arith.constant 3.200000e+01 : f32
    %8 = vector.broadcast %cst_9 : f32 to vector<2x8x1xf32>
    %9 = arith.divf %7, %8 : vector<2x8x1xf32>
    %10 = vector.broadcast %9 : vector<2x8x1xf32> to vector<2x8x32xf32>
    %11 = arith.subf %3, %10 : vector<2x8x32xf32>
    %12 = arith.mulf %11, %11 : vector<2x8x32xf32>
    %cst_10 = arith.constant dense<0.000000e+00> : vector<2x8xf32>
    %13 = vector.multi_reduction <add>, %12, %cst_10 [2] : vector<2x8x32xf32> to vector<2x8xf32>
    %14 = vector.shape_cast %13 : vector<2x8xf32> to vector<2x8x1xf32>
    %cst_11 = arith.constant 3.200000e+01 : f32
    %15 = vector.broadcast %cst_11 : f32 to vector<2x8x1xf32>
    %16 = arith.divf %14, %15 : vector<2x8x1xf32>
    %17 = vector.broadcast %9 : vector<2x8x1xf32> to vector<2x8x32xf32>
    %18 = arith.subf %3, %17 : vector<2x8x32xf32>
    %cst_12 = arith.constant 9.99999974E-6 : f32
    %19 = vector.broadcast %cst_12 : f32 to vector<2x8x1xf32>
    %20 = arith.addf %16, %19 : vector<2x8x1xf32>
    %21 = math.rsqrt %20 : vector<2x8x1xf32>
    %22 = vector.broadcast %21 : vector<2x8x1xf32> to vector<2x8x32xf32>
    %23 = arith.mulf %18, %22 : vector<2x8x32xf32>
    %24 = vector.broadcast %4 : vector<1x1x32xf32> to vector<2x8x32xf32>
    %25 = arith.mulf %23, %24 : vector<2x8x32xf32>
    %26 = vector.broadcast %5 : vector<1x1x32xf32> to vector<2x8x32xf32>
    %27 = arith.addf %25, %26 : vector<2x8x32xf32>
    %28 = vector.shape_cast %27 : vector<2x8x32xf32> to vector<16x32xf32>
    %29 = arith.truncf %28 : vector<16x32xf32> to vector<16x32xbf16>
    %c0_13 = arith.constant 0 : index
    %c0_14 = arith.constant 0 : index
    %c0_15 = arith.constant 0 : index
    %30 = vector.load %arg5[%c0_13, %c0_14, %c0_15] : memref<1x32x96xbf16, #tpu.memory_space<vmem>>, vector<1x32x96xbf16>
    %31 = vector.shape_cast %30 : vector<1x32x96xbf16> to vector<32x96xbf16>
    %cst_16 = arith.constant dense<0.000000e+00> : vector<16x96xf32>
    %32 = tpu.matmul %29, %31, %cst_16 {dimension_numbers = #tpu.dot_dimension_numbers<[1], [0], [0], [1], [0, 0, 1, 1], [], []>} : vector<16x32xbf16>, vector<32x96xbf16>, vector<16x96xf32> -> vector<16x96xf32>
    %c0_17 = arith.constant 0 : index
    %c0_18 = arith.constant 0 : index
    %c0_19 = arith.constant 0 : index
    %33 = vector.load %arg6[%c0_17, %c0_18, %c0_19] : memref<1x1x96xf32, #tpu.memory_space<vmem>>, vector<1x1x96xf32>
    %34 = vector.shape_cast %33 : vector<1x1x96xf32> to vector<1x96xf32>
    %35 = vector.broadcast %34 : vector<1x96xf32> to vector<16x96xf32>
    %36 = arith.addf %32, %35 : vector<16x96xf32>
    %37 = arith.truncf %36 : vector<16x96xf32> to vector<16x96xbf16>
    %38 = vector.shape_cast %37 : vector<16x96xbf16> to vector<2x8x96xbf16>
    %39 = vector.extract_strided_slice %38 {offsets = [0, 0, 0], sizes = [2, 8, 16], strides = [1, 1, 1]} : vector<2x8x96xbf16> to vector<2x8x16xbf16>
    %40 = vector.extract_strided_slice %38 {offsets = [0, 0, 16], sizes = [2, 8, 16], strides = [1, 1, 1]} : vector<2x8x96xbf16> to vector<2x8x16xbf16>
    %41 = vector.shape_cast %39 : vector<2x8x16xbf16> to vector<1x2x8x16xbf16>
    %42 = vector.shape_cast %40 : vector<2x8x16xbf16> to vector<1x2x8x16xbf16>
    %43 = tpu.concatenate %41, %42 in 0 : vector<1x2x8x16xbf16>, vector<1x2x8x16xbf16> -> vector<2x2x8x16xbf16>
    %44 = vector.shape_cast %43 : vector<2x2x8x16xbf16> to vector<4x8x16xbf16>
    %45 = vector.extract_strided_slice %38 {offsets = [0, 0, 32], sizes = [2, 8, 16], strides = [1, 1, 1]} : vector<2x8x96xbf16> to vector<2x8x16xbf16>
    %46 = vector.extract_strided_slice %38 {offsets = [0, 0, 48], sizes = [2, 8, 16], strides = [1, 1, 1]} : vector<2x8x96xbf16> to vector<2x8x16xbf16>
    %47 = vector.shape_cast %45 : vector<2x8x16xbf16> to vector<1x2x8x16xbf16>
    %48 = vector.shape_cast %46 : vector<2x8x16xbf16> to vector<1x2x8x16xbf16>
    %49 = tpu.concatenate %47, %48 in 0 : vector<1x2x8x16xbf16>, vector<1x2x8x16xbf16> -> vector<2x2x8x16xbf16>
    %50 = vector.shape_cast %49 : vector<2x2x8x16xbf16> to vector<4x8x16xbf16>
    %51 = vector.extract_strided_slice %38 {offsets = [0, 0, 64], sizes = [2, 8, 16], strides = [1, 1, 1]} : vector<2x8x96xbf16> to vector<2x8x16xbf16>
    %52 = vector.extract_strided_slice %38 {offsets = [0, 0, 80], sizes = [2, 8, 16], strides = [1, 1, 1]} : vector<2x8x96xbf16> to vector<2x8x16xbf16>
    %53 = vector.shape_cast %51 : vector<2x8x16xbf16> to vector<1x2x8x16xbf16>
    %54 = vector.shape_cast %52 : vector<2x8x16xbf16> to vector<1x2x8x16xbf16>
    %55 = tpu.concatenate %53, %54 in 0 : vector<1x2x8x16xbf16>, vector<1x2x8x16xbf16> -> vector<2x2x8x16xbf16>
    %56 = vector.shape_cast %55 : vector<2x2x8x16xbf16> to vector<4x8x16xbf16>
    %cst_20 = arith.constant -1.000000e+30 : f32
    %57 = vector.broadcast %cst_20 : f32 to vector<4x8x1xf32>
    %cst_21 = arith.constant 0.000000e+00 : f32
    %58 = vector.broadcast %cst_21 : f32 to vector<4x8x1xf32>
    %cst_22 = arith.constant 0.000000e+00 : f32
    %59 = vector.broadcast %cst_22 : f32 to vector<4x8x16xf32>
    "tpu.trace_start"() <{level = 10 : i32, message = "gqe,gke->gqk"}> : () -> ()
    %cst_23 = arith.constant dense<0.000000e+00> : vector<4x8x8xf32>
    %60 = tpu.matmul %44, %50, %cst_23 {dimension_numbers = #tpu.dot_dimension_numbers<[2], [2], [1], [1], [0, 0, 0, 1, 1, 1], [0], [0]>} : vector<4x8x16xbf16>, vector<4x8x16xbf16>, vector<4x8x8xf32> -> vector<4x8x8xf32>
    "tpu.trace_stop"() : () -> ()
    %61 = tpu.iota {dimensions = array<i32: 0>} : vector<8x8xi32>
    %c0_i32_24 = arith.constant 0 : i32
    %62 = vector.broadcast %c0_i32_24 : i32 to vector<8x8xi32>
    %63 = arith.addi %61, %62 : vector<8x8xi32>
    %64 = tpu.iota {dimensions = array<i32: 1>} : vector<8x8xi32>
    %c0_i32_25 = arith.constant 0 : i32
    %65 = vector.broadcast %c0_i32_25 : i32 to vector<8x8xi32>
    %66 = arith.addi %64, %65 : vector<8x8xi32>
    %67 = arith.cmpi sge, %63, %66 : vector<8x8xi32>
    %68 = vector.shape_cast %67 : vector<8x8xi1> to vector<1x8x8xi1>
    %cst_26 = arith.constant -1.000000e+30 : f32
    %69 = vector.shape_cast %68 : vector<1x8x8xi1> to vector<1x8x8xi1>
    %70 = vector.broadcast %69 : vector<1x8x8xi1> to vector<4x8x8xi1>
    %71 = vector.broadcast %cst_26 : f32 to vector<4x8x8xf32>
    %72 = arith.select %70, %60, %71 : vector<4x8x8xi1>, vector<4x8x8xf32>
    %cst_27 = arith.constant dense<0xFF800000> : vector<4x8xf32>
    %73 = vector.multi_reduction <maximumf>, %72, %cst_27 [2] : vector<4x8x8xf32> to vector<4x8xf32>
    %74 = vector.shape_cast %73 : vector<4x8xf32> to vector<4x8x1xf32>
    %75 = arith.maximumf %57, %74 : vector<4x8x1xf32>
    %76 = arith.subf %57, %75 : vector<4x8x1xf32>
    %77 = math.exp %76 : vector<4x8x1xf32>
    %78 = vector.broadcast %75 : vector<4x8x1xf32> to vector<4x8x8xf32>
    %79 = arith.subf %72, %78 : vector<4x8x8xf32>
    %80 = math.exp %79 : vector<4x8x8xf32>
    %81 = arith.mulf %77, %58 : vector<4x8x1xf32>
    %cst_28 = arith.constant dense<0.000000e+00> : vector<4x8xf32>
    %82 = vector.multi_reduction <add>, %80, %cst_28 [2] : vector<4x8x8xf32> to vector<4x8xf32>
    %83 = vector.shape_cast %82 : vector<4x8xf32> to vector<4x8x1xf32>
    %84 = arith.addf %81, %83 : vector<4x8x1xf32>
    %85 = vector.broadcast %77 : vector<4x8x1xf32> to vector<4x8x16xf32>
    %86 = arith.mulf %85, %59 : vector<4x8x16xf32>
    %87 = arith.truncf %80 : vector<4x8x8xf32> to vector<4x8x8xbf16>
    "tpu.trace_start"() <{level = 10 : i32, message = "gqk,gke->gqe"}> : () -> ()
    %cst_29 = arith.constant dense<0.000000e+00> : vector<4x8x16xf32>
    %88 = tpu.matmul %87, %56, %cst_29 {dimension_numbers = #tpu.dot_dimension_numbers<[2], [1], [1], [2], [0, 0, 0, 1, 1, 2], [0], [0]>} : vector<4x8x8xbf16>, vector<4x8x16xbf16>, vector<4x8x16xf32> -> vector<4x8x16xf32>
    "tpu.trace_stop"() : () -> ()
    %89 = arith.addf %86, %88 : vector<4x8x16xf32>
    %90 = tpu.reciprocal %84 {approx = true} : vector<4x8x1xf32> -> vector<4x8x1xf32>
    %91 = vector.broadcast %90 : vector<4x8x1xf32> to vector<4x8x16xf32>
    %92 = arith.mulf %89, %91 : vector<4x8x16xf32>
    %93 = vector.shape_cast %92 : vector<4x8x16xf32> to vector<2x2x8x16xf32>
    %94 = vector.extract_strided_slice %93 {offsets = [0, 0, 0, 0], sizes = [1, 2, 8, 16], strides = [1, 1, 1, 1]} : vector<2x2x8x16xf32> to vector<1x2x8x16xf32>
    %95 = vector.shape_cast %94 : vector<1x2x8x16xf32> to vector<2x8x16xf32>
    %96 = vector.extract_strided_slice %93 {offsets = [1, 0, 0, 0], sizes = [1, 2, 8, 16], strides = [1, 1, 1, 1]} : vector<2x2x8x16xf32> to vector<1x2x8x16xf32>
    %97 = vector.shape_cast %96 : vector<1x2x8x16xf32> to vector<2x8x16xf32>
    %98 = tpu.concatenate %95, %97 in 2 : vector<2x8x16xf32>, vector<2x8x16xf32> -> vector<2x8x32xf32>
    %99 = vector.shape_cast %98 : vector<2x8x32xf32> to vector<16x32xf32>
    %100 = arith.truncf %99 : vector<16x32xf32> to vector<16x32xbf16>
    %c0_30 = arith.constant 0 : index
    %c0_31 = arith.constant 0 : index
    %c0_32 = arith.constant 0 : index
    %101 = vector.load %arg7[%c0_30, %c0_31, %c0_32] : memref<1x32x32xbf16, #tpu.memory_space<vmem>>, vector<1x32x32xbf16>
    %102 = vector.shape_cast %101 : vector<1x32x32xbf16> to vector<32x32xbf16>
    %cst_33 = arith.constant dense<0.000000e+00> : vector<16x32xf32>
    %103 = tpu.matmul %100, %102, %cst_33 {dimension_numbers = #tpu.dot_dimension_numbers<[1], [0], [0], [1], [0, 0, 1, 1], [], []>} : vector<16x32xbf16>, vector<32x32xbf16>, vector<16x32xf32> -> vector<16x32xf32>
    %104 = vector.shape_cast %103 : vector<16x32xf32> to vector<2x8x32xf32>
    %105 = arith.addf %3, %104 : vector<2x8x32xf32>
    %c0_34 = arith.constant 0 : index
    %c0_35 = arith.constant 0 : index
    %c0_36 = arith.constant 0 : index
    %106 = vector.load %arg8[%c0_34, %c0_35, %c0_36] : memref<1x1x32xf32, #tpu.memory_space<vmem>>, vector<1x1x32xf32>
    %c0_37 = arith.constant 0 : index
    %c0_38 = arith.constant 0 : index
    %c0_39 = arith.constant 0 : index
    %107 = vector.load %arg9[%c0_37, %c0_38, %c0_39] : memref<1x1x32xf32, #tpu.memory_space<vmem>>, vector<1x1x32xf32>
    %cst_40 = arith.constant dense<0.000000e+00> : vector<2x8xf32>
    %108 = vector.multi_reduction <add>, %105, %cst_40 [2] : vector<2x8x32xf32> to vector<2x8xf32>
    %109 = vector.shape_cast %108 : vector<2x8xf32> to vector<2x8x1xf32>
    %cst_41 = arith.constant 3.200000e+01 : f32
    %110 = vector.broadcast %cst_41 : f32 to vector<2x8x1xf32>
    %111 = arith.divf %109, %110 : vector<2x8x1xf32>
    %112 = vector.broadcast %111 : vector<2x8x1xf32> to vector<2x8x32xf32>
    %113 = arith.subf %105, %112 : vector<2x8x32xf32>
    %114 = arith.mulf %113, %113 : vector<2x8x32xf32>
    %cst_42 = arith.constant dense<0.000000e+00> : vector<2x8xf32>
    %115 = vector.multi_reduction <add>, %114, %cst_42 [2] : vector<2x8x32xf32> to vector<2x8xf32>
    %116 = vector.shape_cast %115 : vector<2x8xf32> to vector<2x8x1xf32>
    %cst_43 = arith.constant 3.200000e+01 : f32
    %117 = vector.broadcast %cst_43 : f32 to vector<2x8x1xf32>
    %118 = arith.divf %116, %117 : vector<2x8x1xf32>
    %119 = vector.broadcast %111 : vector<2x8x1xf32> to vector<2x8x32xf32>
    %120 = arith.subf %105, %119 : vector<2x8x32xf32>
    %cst_44 = arith.constant 9.99999974E-6 : f32
    %121 = vector.broadcast %cst_44 : f32 to vector<2x8x1xf32>
    %122 = arith.addf %118, %121 : vector<2x8x1xf32>
    %123 = math.rsqrt %122 : vector<2x8x1xf32>
    %124 = vector.broadcast %123 : vector<2x8x1xf32> to vector<2x8x32xf32>
    %125 = arith.mulf %120, %124 : vector<2x8x32xf32>
    %126 = vector.broadcast %106 : vector<1x1x32xf32> to vector<2x8x32xf32>
    %127 = arith.mulf %125, %126 : vector<2x8x32xf32>
    %128 = vector.broadcast %107 : vector<1x1x32xf32> to vector<2x8x32xf32>
    %129 = arith.addf %127, %128 : vector<2x8x32xf32>
    %130 = vector.shape_cast %129 : vector<2x8x32xf32> to vector<16x32xf32>
    %131 = arith.truncf %130 : vector<16x32xf32> to vector<16x32xbf16>
    %cst_45 = arith.constant 0.000000e+00 : f32
    %132 = vector.broadcast %cst_45 : f32 to vector<16x32xf32>
    %c0_46 = arith.constant 0 : index
    %c0_47 = arith.constant 0 : index
    %c0_48 = arith.constant 0 : index
    %133 = vector.load %arg10[%c0_46, %c0_47, %c0_48] : memref<1x32x64xbf16, #tpu.memory_space<vmem>>, vector<1x32x64xbf16>
    %134 = vector.shape_cast %133 : vector<1x32x64xbf16> to vector<32x64xbf16>
    %cst_49 = arith.constant dense<0.000000e+00> : vector<16x64xf32>
    %135 = tpu.matmul %131, %134, %cst_49 {dimension_numbers = #tpu.dot_dimension_numbers<[1], [0], [0], [1], [0, 0, 1, 1], [], []>} : vector<16x32xbf16>, vector<32x64xbf16>, vector<16x64xf32> -> vector<16x64xf32>
    %c0_50 = arith.constant 0 : index
    %c0_51 = arith.constant 0 : index
    %c0_52 = arith.constant 0 : index
    %136 = vector.load %arg11[%c0_50, %c0_51, %c0_52] : memref<1x1x64xf32, #tpu.memory_space<vmem>>, vector<1x1x64xf32>
    %137 = vector.shape_cast %136 : vector<1x1x64xf32> to vector<1x64xf32>
    %138 = vector.broadcast %137 : vector<1x64xf32> to vector<16x64xf32>
    %139 = arith.addf %135, %138 : vector<16x64xf32>
    %cst_53 = arith.constant 0.000000e+00 : f32
    %140 = vector.broadcast %cst_53 : f32 to vector<16x64xf32>
    %141 = arith.maximumf %139, %140 : vector<16x64xf32>
    %142 = arith.truncf %141 : vector<16x64xf32> to vector<16x64xbf16>
    %c0_54 = arith.constant 0 : index
    %c0_55 = arith.constant 0 : index
    %c0_56 = arith.constant 0 : index
    %143 = vector.load %arg12[%c0_54, %c0_55, %c0_56] : memref<1x64x32xbf16, #tpu.memory_space<vmem>>, vector<1x64x32xbf16>
    %144 = vector.shape_cast %143 : vector<1x64x32xbf16> to vector<64x32xbf16>
    %cst_57 = arith.constant dense<0.000000e+00> : vector<16x32xf32>
    %145 = tpu.matmul %142, %144, %cst_57 {dimension_numbers = #tpu.dot_dimension_numbers<[1], [0], [0], [1], [0, 0, 1, 1], [], []>} : vector<16x64xbf16>, vector<64x32xbf16>, vector<16x32xf32> -> vector<16x32xf32>
    %146 = arith.addf %132, %145 : vector<16x32xf32>
    %c0_58 = arith.constant 0 : index
    %c0_59 = arith.constant 0 : index
    %c0_60 = arith.constant 0 : index
    %147 = vector.load %arg13[%c0_58, %c0_59, %c0_60] : memref<1x1x32xf32, #tpu.memory_space<vmem>>, vector<1x1x32xf32>
    %148 = vector.shape_cast %147 : vector<1x1x32xf32> to vector<1x32xf32>
    %149 = vector.broadcast %148 : vector<1x32xf32> to vector<16x32xf32>
    %150 = arith.addf %146, %149 : vector<16x32xf32>
    %151 = vector.shape_cast %150 : vector<16x32xf32> to vector<2x8x32xf32>
    %152 = arith.addf %105, %151 : vector<2x8x32xf32>
    %c0_61 = arith.constant 0 : index
    %c0_62 = arith.constant 0 : index
    %c0_63 = arith.constant 0 : index
    %153 = vector.load %arg14[%c0_61, %c0_62, %c0_63] : memref<2x8x32xf32, #tpu.memory_space<vmem>>, vector<2x8x32xf32>
    tpu.vector_store %arg14[%c0_61, %c0_62, %c0_63], %152 {strides = array<i32>} : memref<2x8x32xf32, #tpu.memory_space<vmem>>, vector<2x8x32xf32>,
    return
  }
  func.func @transform_0(%arg0: i32, %arg1: i32) -> (i32, i32, i32) {
    %c0_i32 = arith.constant 0 : i32
    %c0_i32_0 = arith.constant 0 : i32
    %c0_i32_1 = arith.constant 0 : i32
    return %arg0, %c0_i32, %c0_i32_0 : i32, i32, i32
  }
  func.func @transform_1(%arg0: i32, %arg1: i32) -> (i32, i32, i32) {
    %c0_i32 = arith.constant 0 : i32
    %c0_i32_0 = arith.constant 0 : i32
    %c0_i32_1 = arith.constant 0 : i32
    return %arg1, %c0_i32, %c0_i32_0 : i32, i32, i32
  }
  func.func @transform_2(%arg0: i32, %arg1: i32) -> (i32, i32, i32) {
    %c0_i32 = arith.constant 0 : i32
    %c0_i32_0 = arith.constant 0 : i32
    %c0_i32_1 = arith.constant 0 : i32
    return %arg1, %c0_i32, %c0_i32_0 : i32, i32, i32
  }
  func.func @transform_3(%arg0: i32, %arg1: i32) -> (i32, i32, i32) {
    %c0_i32 = arith.constant 0 : i32
    %c0_i32_0 = arith.constant 0 : i32
    %c0_i32_1 = arith.constant 0 : i32
    return %arg1, %c0_i32, %c0_i32_0 : i32, i32, i32
  }
  func.func @transform_4(%arg0: i32, %arg1: i32) -> (i32, i32, i32) {
    %c0_i32 = arith.constant 0 : i32
    %c0_i32_0 = arith.constant 0 : i32
    %c0_i32_1 = arith.constant 0 : i32
    return %arg1, %c0_i32, %c0_i32_0 : i32, i32, i32
  }
  func.func @transform_5(%arg0: i32, %arg1: i32) -> (i32, i32, i32) {
    %c0_i32 = arith.constant 0 : i32
    %c0_i32_0 = arith.constant 0 : i32
    %c0_i32_1 = arith.constant 0 : i32
    return %arg1, %c0_i32, %c0_i32_0 : i32, i32, i32
  }
  func.func @transform_6(%arg0: i32, %arg1: i32) -> (i32, i32, i32) {
    %c0_i32 = arith.constant 0 : i32
    %c0_i32_0 = arith.constant 0 : i32
    %c0_i32_1 = arith.constant 0 : i32
    return %arg1, %c0_i32, %c0_i32_0 : i32, i32, i32
  }
  func.func @transform_7(%arg0: i32, %arg1: i32) -> (i32, i32, i32) {
    %c0_i32 = arith.constant 0 : i32
    %c0_i32_0 = arith.constant 0 : i32
    %c0_i32_1 = arith.constant 0 : i32
    return %arg1, %c0_i32, %c0_i32_0 : i32, i32, i32
  }
  func.func @transform_8(%arg0: i32, %arg1: i32) -> (i32, i32, i32) {
    %c0_i32 = arith.constant 0 : i32
    %c0_i32_0 = arith.constant 0 : i32
    %c0_i32_1 = arith.constant 0 : i32
    return %arg1, %c0_i32, %c0_i32_0 : i32, i32, i32
  }
  func.func @transform_9(%arg0: i32, %arg1: i32) -> (i32, i32, i32) {
    %c0_i32 = arith.constant 0 : i32
    %c0_i32_0 = arith.constant 0 : i32
    %c0_i32_1 = arith.constant 0 : i32
    return %arg1, %c0_i32, %c0_i32_0 : i32, i32, i32
  }
  func.func @transform_10(%arg0: i32, %arg1: i32) -> (i32, i32, i32) {
    %c0_i32 = arith.constant 0 : i32
    %c0_i32_0 = arith.constant 0 : i32
    %c0_i32_1 = arith.constant 0 : i32
    return %arg1, %c0_i32, %c0_i32_0 : i32, i32, i32
  }
  func.func @transform_11(%arg0: i32, %arg1: i32) -> (i32, i32, i32) {
    %c0_i32 = arith.constant 0 : i32
    %c0_i32_0 = arith.constant 0 : i32
    %c0_i32_1 = arith.constant 0 : i32
    return %arg1, %c0_i32, %c0_i32_0 : i32, i32, i32
  }
  func.func @transform_12(%arg0: i32, %arg1: i32) -> (i32, i32, i32) {
    %c0_i32 = arith.constant 0 : i32
    %c0_i32_0 = arith.constant 0 : i32
    %c0_i32_1 = arith.constant 0 : i32
    return %arg0, %c0_i32, %c0_i32_0 : i32, i32, i32
  }
}

</mosaic_0001>

<llo_original>
// kernel: forward.3
$region0: #{forward.3}
  #allocation0 [shape = 'u32[]', space=smem, size = 0x4, offset = 0x4, fixed_abs, tag = 'smem constant byte address 0x4 - core index']
  #allocation1 [shape = 'u32[72,128]{1,0:T(1,128)}', space=vmem, size = 0x9000, scoped, tag = 'internal scratch']
  #allocation2 [shape = 'bf16[16,32]{1,0:T(8,128)(2,1)}', space=vmem, size = 0x1000, scoped, tag = 'scratch operand']
  %s0 = inlined_call_operand.vmem [shape: f32[16,32], index: 0, kind: input, shape index: {}]
  %s1 = inlined_call_operand.vmem [shape: f32[1,32], index: 1, kind: input, shape index: {}]
  %s2 = inlined_call_operand.vmem [shape: f32[1,32], index: 2, kind: input, shape index: {}]
  %s3 = inlined_call_operand.vmem [shape: bf16[32,128], index: 3, kind: input, shape index: {}]
  %s4 = inlined_call_operand.vmem [shape: f32[1,128], index: 4, kind: input, shape index: {}]
  %s5 = inlined_call_operand.vmem [shape: f32[16,128], index: 5, kind: output, shape index: {}]
  %s6 = sld [smem:[#allocation0]]
  $region34: #{forward.3} parent=0
    _
  %s8 = ssub.s32 1, %s6
  %s9 = scalar_select 0, %s8, %s6
  // Predicated region
  $region2: #{forward.3} parent=0 // pred_check
    _
  $region3: #{forward.3} parent=0 // pred_check_branch
    %11 = sbr.rel (0) target = $region5
  $region4: #{forward.3} parent=0 // pred_region
    _
  $region5: #{forward.3} parent=0 // pred_fallthru
    _
  // Predicated region
  $region6: #{forward.3} parent=0 // pred_check
    _
  $region7: #{forward.3} parent=0 // pred_check_branch
    %13 = sbr.rel (0) target = $region9
  $region8: #{forward.3} parent=0 // pred_region
    _
  $region9: #{forward.3} parent=0 // pred_fallthru
    _
  // Predicated region
  $region10: #{forward.3} parent=0 // pred_check
    _
  $region11: #{forward.3} parent=0 // pred_check_branch
    %15 = sbr.rel (0) target = $region13
  $region12: #{forward.3} parent=0 // pred_region
    _
  $region13: #{forward.3} parent=0 // pred_fallthru
    _
  // Predicated region
  $region14: #{forward.3} parent=0 // pred_check
    _
  $region15: #{forward.3} parent=0 // pred_check_branch
    %17 = sbr.rel (0) target = $region17
  $region16: #{forward.3} parent=0 // pred_region
    _
  $region17: #{forward.3} parent=0 // pred_fallthru
    _
  // Predicated region
  $region18: #{forward.3} parent=0 // pred_check
    _
  $region19: #{forward.3} parent=0 // pred_check_branch
    %19 = sbr.rel (0) target = $region21
  $region20: #{forward.3} parent=0 // pred_region
    _
  $region21: #{forward.3} parent=0 // pred_fallthru
    _
  %p21 = scmp.eq.s32.totalorder 0, 0
  // Predicated region
  $region22: #{forward.3} parent=0 // pred_check
    %p22 = pneg %p21
  $region23: #{forward.3} parent=0 // pred_check_branch
    %24 = sbr.rel (%p22) target = $region25
  $region24: #{forward.3} parent=0 // pred_region
    %v25 = vld [vmem:[%s0] sm:$0xff]
    %v26 = vld [vmem:[%s0 + $0x8] sm:$0xff]
    %v27 = vld [vmem:[%s1] sm:$0x1]
    %v28 = vld [vmem:[%s2] sm:$0x1]
    %vm29 = vcmask 261120
    %v30 = vsel %vm29, %v25, 0.0
    %31 = vadd.xlane.f32.xlu0 %v30
    %v32 = vpop.xlane.xlu0 %31
    %v33 = vsel %vm29, %v26, 0.0
    %34 = vadd.xlane.f32.xlu0 %v33
    %v35 = vpop.xlane.xlu0 %34
    %v36 = vrcp.pop 32.0
    %v37 = vmul.f32 32.0, %v36
    %v38 = vsub.f32 1.0, %v37
    %v39 = vmul.f32 %v36, %v38
    %v40 = vadd.f32 %v36, %v39
    %vm41 = vweird.f32 %v36
    %v42 = vsel %vm41, %v36, %v40
    %v43 = vmul.f32 %v32, %v42
    %v44 = vmul.f32 %v35, %v42
    %v45 = vsub.f32 %v25, %v43
    %v46 = vsub.f32 %v26, %v44
    %v47 = vmul.f32 %v45, %v45
    %v48 = vmul.f32 %v46, %v46
    %v49 = vsel %vm29, %v47, 0.0
    %50 = vadd.xlane.f32.xlu0 %v49
    %v51 = vpop.xlane.xlu0 %50
    %v52 = vsel %vm29, %v48, 0.0
    %53 = vadd.xlane.f32.xlu0 %v52
    %v54 = vpop.xlane.xlu0 %53
    %v55 = vmul.f32 %v51, %v42
    %v56 = vmul.f32 %v54, %v42
    %v57 = vadd.f32 %v55, 1e-05
    %v58 = vadd.f32 %v56, 1e-05
    %v59 = vrsqrt.pop %v57
    %v60 = vmul.f32 %v59, %v57
    %v61 = vmul.f32 %v60, %v59
    %v62 = vmul.f32 0.5, %v61
    %v63 = vsub.f32 1.5, %v62
    %v64 = vmul.f32 %v59, %v63
    %vm65 = vweird.f32 %v57
    %vm66 = vweird.f32 %v59
    %vm67 = vmor %vm65, %vm66
    %v68 = vsel %vm67, %v59, %v64
    %v69 = vrsqrt.pop %v58
    %v70 = vmul.f32 %v69, %v58
    %v71 = vmul.f32 %v70, %v69
    %v72 = vmul.f32 0.5, %v71
    %v73 = vsub.f32 1.5, %v72
    %v74 = vmul.f32 %v69, %v73
    %vm75 = vweird.f32 %v58
    %vm76 = vweird.f32 %v69
    %vm77 = vmor %vm75, %vm76
    %v78 = vsel %vm77, %v69, %v74
    %v79 = vmul.f32 %v45, %v68
    %v80 = vmul.f32 %v46, %v78
    %v82 = vperm.slane %v27, 0
    %v84 = vmul.f32 %v79, %v82
    %v85 = vmul.f32 %v80, %v82
    %v87 = vperm.slane %v28, 0
    %v89 = vadd.f32 %v84, %v87
    %v90 = vadd.f32 %v85, %v87
    %v91 = vpack.c.bf16 %v89, %v89
    %v92 = vpack.c.bf16 %v90, %v90
    %vm93 = vcmask 257024
    %94 = vst.msk [vmem:[#allocation2] sm:$0xf] %vm93, %v91
    %95 = vst.msk [vmem:[#allocation2 + $0x4] sm:$0xf] %vm93, %v92
  $region25: #{forward.3} parent=0 // pred_fallthru
    _
  %v96 = vld [vmem:[#allocation2] sm:$0xf]
  %v97 = vld [vmem:[#allocation2 + $0x4] sm:$0xf]
  %v98 = vld [vmem:[%s3] sm:$0xf]
  %v99 = vld [vmem:[%s3 + $0x4] sm:$0xf]
  %v100 = vld [vmem:[%s3 + $0x8] sm:$0xf]
  %v101 = vld [vmem:[%s3 + $0xc] sm:$0xf]
  %v102 = vld [vmem:[%s4] sm:$0x1]
  %v104 = vperm.slane %v102, 0
  %v108 = vunpack.c.l.b16 %v96
  %v109 = vunpack.c.l.b16 %v97
  %v110 = vpack.c.b16 %v109, %v108
  %v115 = vunpack.c.l.b16 %v98
  %v116 = vunpack.c.l.b16 %v99
  %v117 = vunpack.c.l.b16 %v100
  %v118 = vunpack.c.l.b16 %v101
  %v119 = vpack.c.b16 %v116, %v115
  %v120 = vpack.c.b16 %v118, %v117
  %vm123 = vcmask 261120
  %v125 = vsel %vm123, %v110, 0
  %127 = vmatpush.bf16.msra.mxu0 0
  %128 = vmatpush.bf16.msra.mxu0 0
  %129 = vmatpush.bf16.msra.mxu0 0
  %130 = vmatpush.bf16.msra.mxu0 0
  %131 = vmatpush.bf16.msra.mxu0 0
  %132 = vmatpush.bf16.msra.mxu0 0
  %133 = vmatpush.bf16.msra.mxu0 %v120
  %134 = vmatpush.bf16.msra.mxu0 %v119
  %135 = vmatmul.bf16.gmra.mxu0 %v125
  %v136 = vpop.f32.mrf.mxu0
  %v137 = vadd.f32 %v104, %v136
  %v138 = vpop.f32.mrf.mxu0
  %v139 = vadd.f32 %v104, %v138
  %140 = vdwg.mxu0
  %141 = vst [vmem:[%s5] sm:$0xff] %v137
  %142 = vst [vmem:[%s5 + $0x8] sm:$0xff] %v139
  // Predicated region
  $region26: #{forward.3} parent=0 // pred_check
    _
  $region27: #{forward.3} parent=0 // pred_check_branch
    %144 = sbr.rel (0) target = $region29
  $region28: #{forward.3} parent=0 // pred_region
    _
  $region29: #{forward.3} parent=0 // pred_fallthru
    _
  // Predicated region
  $region30: #{forward.3} parent=0 // pred_check
    _
  $region31: #{forward.3} parent=0 // pred_check_branch
    %146 = sbr.rel (0) target = $region33
  $region32: #{forward.3} parent=0 // pred_region
    _
  $region33: #{forward.3} parent=0 // pred_fallthru
    _

// kernel: forward.2
$region0: #{forward.2}
  #allocation0 [shape = 'u32[]', space=smem, size = 0x4, offset = 0x4, fixed_abs, tag = 'smem constant byte address 0x4 - core index']
  #allocation1 [shape = 'u32[72,128]{1,0:T(1,128)}', space=vmem, size = 0x9000, scoped, tag = 'internal scratch']
  %s0 = inlined_call_operand.vmem [shape: f32[2,8,32], index: 0, kind: input, shape index: {}]
  %s1 = inlined_call_operand.vmem [shape: f32[2,1,32], index: 1, kind: input, shape index: {}]
  %s2 = inlined_call_operand.vmem [shape: f32[2,1,32], index: 2, kind: input, shape index: {}]
  %s3 = inlined_call_operand.vmem [shape: bf16[2,32,96], index: 3, kind: input, shape index: {}]
  %s4 = inlined_call_operand.vmem [shape: f32[2,1,96], index: 4, kind: input, shape index: {}]
  %s5 = inlined_call_operand.vmem [shape: bf16[2,32,32], index: 5, kind: input, shape index: {}]
  %s6 = inlined_call_operand.vmem [shape: f32[2,1,32], index: 6, kind: input, shape index: {}]
  %s7 = inlined_call_operand.vmem [shape: f32[2,1,32], index: 7, kind: input, shape index: {}]
  %s8 = inlined_call_operand.vmem [shape: bf16[2,32,64], index: 8, kind: input, shape index: {}]
  %s9 = inlined_call_operand.vmem [shape: f32[2,1,64], index: 9, kind: input, shape index: {}]
  %s10 = inlined_call_operand.vmem [shape: bf16[2,64,32], index: 10, kind: input, shape index: {}]
  %s11 = inlined_call_operand.vmem [shape: f32[2,1,32], index: 11, kind: input, shape index: {}]
  %s12 = inlined_call_operand.vmem [shape: f32[2,8,32], index: 12, kind: output, shape index: {}]
  %s13 = sld [smem:[#allocation0]]
  $region85: #{forward.2} parent=0
    _
  %s15 = ssub.s32 1, %s13
  %s16 = scalar_select 0, %s15, %s13
  loop: start=0, step=1, limit=4
  $region2: #{forward.2} parent=0 // loop_pre_header
    _
  $region3: #{forward.2} parent=0 // loop_header
    %s18 = sphi 0, %s22
    %p19 = scmp.ge.s32.totalorder %s18, 4
    %s25 = sphi 0, %s37
    %s26 = sphi 0, %s33
    %s27 = sphi 0, %s25
    %s28 = sphi 0, %s26
    %s29 = sphi 0, %s27
    %s30 = sphi 0, %s28
    %s40 = sphi 0, %s42
    %s43 = sphi 0, %s40
    %s44 = sphi 0, %s43
    %s60 = sphi 0, %s44
    %s66 = sphi 0, %s68
    %s69 = sphi 0, %s66
    %s70 = sphi 0, %s69
    %s86 = sphi 0, %s70
    %s92 = sphi 0, %s94
    %s95 = sphi 0, %s92
    %s96 = sphi 0, %s95
    %s112 = sphi 0, %s96
    %s118 = sphi 0, %s120
    %s121 = sphi 0, %s118
    %s122 = sphi 0, %s121
    %s138 = sphi 0, %s122
    %s144 = sphi 0, %s146
    %s147 = sphi 0, %s144
    %s148 = sphi 0, %s147
    %s164 = sphi 0, %s148
    %s170 = sphi 0, %s172
    %s173 = sphi 0, %s170
    %s174 = sphi 0, %s173
    %s190 = sphi 0, %s174
    %s196 = sphi 0, %s198
    %s199 = sphi 0, %s196
    %s200 = sphi 0, %s199
    %s216 = sphi 0, %s200
    %s222 = sphi 0, %s224
    %s225 = sphi 0, %s222
    %s226 = sphi 0, %s225
    %s242 = sphi 0, %s226
    %s248 = sphi 0, %s250
    %s251 = sphi 0, %s248
    %s252 = sphi 0, %s251
    %s268 = sphi 0, %s252
    %s274 = sphi 0, %s276
    %s277 = sphi 0, %s274
    %s278 = sphi 0, %s277
    %s294 = sphi 0, %s278
    %s300 = sphi 0, %s302
    %s303 = sphi 0, %s300
    %s304 = sphi 0, %s303
    %s320 = sphi 0, %s304
    %s326 = sphi 0, %s328
    %s329 = sphi 0, %s326
    %s330 = sphi 0, %s329
    %s346 = sphi 0, %s330
    %s352 = sphi 0, %s354
    %s355 = sphi 0, %s352
    %s356 = sphi 0, %s355
    %s372 = sphi 0, %s356
  $region4: #{forward.2} parent=0 // loop_header_branch
    %21 = sbr.rel (%p19) target = $region8
  $region5: #{forward.2} parent=0 // loop_body
    %s23 = ssub.s32 %s18, 1
    %s24 = ssub.s32 %s18, 2
    %s31 = sadd.s32 1, %s26
    %p32 = scmp.ge.s32.totalorder %s31, 2
    %s33 = scalar_select %p32, 0, %s31
    %s34 = sadd.s32 1, %s25
    %s35 = scalar_select %p32, %s34, %s25
    %p36 = scmp.ge.s32.totalorder %s35, 1
    %s37 = scalar_select %p36, 0, %s35
    %s38 = ssub.s32 %s25, %s37
    %p39 = scmp.eq.s32.totalorder %s38, 0
    %s41 = sadd.s32 %s40, 1
    %s42 = scalar_select %p39, %s40, %s41
    %p45 = pneg %p39
    %p46 = scmp.eq.s32.totalorder %s18, 1
    %p47 = por %p45, %p46
    %p48 = scmp.ne.s32.totalorder %s40, %s43
    %p49 = scmp.eq.s32.totalorder %s18, 0
    %p50 = por %p48, %p49
    %p51 = scmp.ne.s32.totalorder %s40, %s43
    %p52 = scmp.eq.s32.totalorder %s23, 1
    %p53 = por %p51, %p52
    %p54 = scmp.ne.s32.totalorder %s43, %s44
    %p55 = scmp.eq.s32.totalorder %s23, 0
    %p56 = por %p54, %p55
    %p57 = scmp.ne.s32.totalorder %s43, %s44
    %p58 = scmp.eq.s32.totalorder %s24, 1
    %p59 = por %p57, %p58
    %p61 = scmp.ne.s32.totalorder %s44, %s60
    %p62 = scmp.eq.s32.totalorder %s24, 0
    %p63 = por %p61, %p62
    %s64 = ssub.s32 %s26, %s33
    %p65 = scmp.eq.s32.totalorder %s64, 0
    %s67 = sadd.s32 %s66, 1
    %s68 = scalar_select %p65, %s66, %s67
    %p71 = pneg %p65
    %p72 = scmp.eq.s32.totalorder %s18, 1
    %p73 = por %p71, %p72
    %p74 = scmp.ne.s32.totalorder %s66, %s69
    %p75 = scmp.eq.s32.totalorder %s18, 0
    %p76 = por %p74, %p75
    %p77 = scmp.ne.s32.totalorder %s66, %s69
    %p78 = scmp.eq.s32.totalorder %s23, 1
    %p79 = por %p77, %p78
    %p80 = scmp.ne.s32.totalorder %s69, %s70
    %p81 = scmp.eq.s32.totalorder %s23, 0
    %p82 = por %p80, %p81
    %p83 = scmp.ne.s32.totalorder %s69, %s70
    %p84 = scmp.eq.s32.totalorder %s24, 1
    %p85 = por %p83, %p84
    %p87 = scmp.ne.s32.totalorder %s70, %s86
    %p88 = scmp.eq.s32.totalorder %s24, 0
    %p89 = por %p87, %p88
    %s90 = ssub.s32 %s26, %s33
    %p91 = scmp.eq.s32.totalorder %s90, 0
    %s93 = sadd.s32 %s92, 1
    %s94 = scalar_select %p91, %s92, %s93
    %p97 = pneg %p91
    %p98 = scmp.eq.s32.totalorder %s18, 1
    %p99 = por %p97, %p98
    %p100 = scmp.ne.s32.totalorder %s92, %s95
    %p101 = scmp.eq.s32.totalorder %s18, 0
    %p102 = por %p100, %p101
    %p103 = scmp.ne.s32.totalorder %s92, %s95
    %p104 = scmp.eq.s32.totalorder %s23, 1
    %p105 = por %p103, %p104
    %p106 = scmp.ne.s32.totalorder %s95, %s96
    %p107 = scmp.eq.s32.totalorder %s23, 0
    %p108 = por %p106, %p107
    %p109 = scmp.ne.s32.totalorder %s95, %s96
    %p110 = scmp.eq.s32.totalorder %s24, 1
    %p111 = por %p109, %p110
    %p113 = scmp.ne.s32.totalorder %s96, %s112
    %p114 = scmp.eq.s32.totalorder %s24, 0
    %p115 = por %p113, %p114
    %s116 = ssub.s32 %s26, %s33
    %p117 = scmp.eq.s32.totalorder %s116, 0
    %s119 = sadd.s32 %s118, 1
    %s120 = scalar_select %p117, %s118, %s119
    %p123 = pneg %p117
    %p124 = scmp.eq.s32.totalorder %s18, 1
    %p125 = por %p123, %p124
    %p126 = scmp.ne.s32.totalorder %s118, %s121
    %p127 = scmp.eq.s32.totalorder %s18, 0
    %p128 = por %p126, %p127
    %p129 = scmp.ne.s32.totalorder %s118, %s121
    %p130 = scmp.eq.s32.totalorder %s23, 1
    %p131 = por %p129, %p130
    %p132 = scmp.ne.s32.totalorder %s121, %s122
    %p133 = scmp.eq.s32.totalorder %s23, 0
    %p134 = por %p132, %p133
    %p135 = scmp.ne.s32.totalorder %s121, %s122
    %p136 = scmp.eq.s32.totalorder %s24, 1
    %p137 = por %p135, %p136
    %p139 = scmp.ne.s32.totalorder %s122, %s138
    %p140 = scmp.eq.s32.totalorder %s24, 0
    %p141 = por %p139, %p140
    %s142 = ssub.s32 %s26, %s33
    %p143 = scmp.eq.s32.totalorder %s142, 0
    %s145 = sadd.s32 %s144, 1
    %s146 = scalar_select %p143, %s144, %s145
    %p149 = pneg %p143
    %p150 = scmp.eq.s32.totalorder %s18, 1
    %p151 = por %p149, %p150
    %p152 = scmp.ne.s32.totalorder %s144, %s147
    %p153 = scmp.eq.s32.totalorder %s18, 0
    %p154 = por %p152, %p153
    %p155 = scmp.ne.s32.totalorder %s144, %s147
    %p156 = scmp.eq.s32.totalorder %s23, 1
    %p157 = por %p155, %p156
    %p158 = scmp.ne.s32.totalorder %s147, %s148
    %p159 = scmp.eq.s32.totalorder %s23, 0
    %p160 = por %p158, %p159
    %p161 = scmp.ne.s32.totalorder %s147, %s148
    %p162 = scmp.eq.s32.totalorder %s24, 1
    %p163 = por %p161, %p162
    %p165 = scmp.ne.s32.totalorder %s148, %s164
    %p166 = scmp.eq.s32.totalorder %s24, 0
    %p167 = por %p165, %p166
    %s168 = ssub.s32 %s26, %s33
    %p169 = scmp.eq.s32.totalorder %s168, 0
    %s171 = sadd.s32 %s170, 1
    %s172 = scalar_select %p169, %s170, %s171
    %p175 = pneg %p169
    %p176 = scmp.eq.s32.totalorder %s18, 1
    %p177 = por %p175, %p176
    %p178 = scmp.ne.s32.totalorder %s170, %s173
    %p179 = scmp.eq.s32.totalorder %s18, 0
    %p180 = por %p178, %p179
    %p181 = scmp.ne.s32.totalorder %s170, %s173
    %p182 = scmp.eq.s32.totalorder %s23, 1
    %p183 = por %p181, %p182
    %p184 = scmp.ne.s32.totalorder %s173, %s174
    %p185 = scmp.eq.s32.totalorder %s23, 0
    %p186 = por %p184, %p185
    %p187 = scmp.ne.s32.totalorder %s173, %s174
    %p188 = scmp.eq.s32.totalorder %s24, 1
    %p189 = por %p187, %p188
    %p191 = scmp.ne.s32.totalorder %s174, %s190
    %p192 = scmp.eq.s32.totalorder %s24, 0
    %p193 = por %p191, %p192
    %s194 = ssub.s32 %s26, %s33
    %p195 = scmp.eq.s32.totalorder %s194, 0
    %s197 = sadd.s32 %s196, 1
    %s198 = scalar_select %p195, %s196, %s197
    %p201 = pneg %p195
    %p202 = scmp.eq.s32.totalorder %s18, 1
    %p203 = por %p201, %p202
    %p204 = scmp.ne.s32.totalorder %s196, %s199
    %p205 = scmp.eq.s32.totalorder %s18, 0
    %p206 = por %p204, %p205
    %p207 = scmp.ne.s32.totalorder %s196, %s199
    %p208 = scmp.eq.s32.totalorder %s23, 1
    %p209 = por %p207, %p208
    %p210 = scmp.ne.s32.totalorder %s199, %s200
    %p211 = scmp.eq.s32.totalorder %s23, 0
    %p212 = por %p210, %p211
    %p213 = scmp.ne.s32.totalorder %s199, %s200
    %p214 = scmp.eq.s32.totalorder %s24, 1
    %p215 = por %p213, %p214
    %p217 = scmp.ne.s32.totalorder %s200, %s216
    %p218 = scmp.eq.s32.totalorder %s24, 0
    %p219 = por %p217, %p218
    %s220 = ssub.s32 %s26, %s33
    %p221 = scmp.eq.s32.totalorder %s220, 0
    %s223 = sadd.s32 %s222, 1
    %s224 = scalar_select %p221, %s222, %s223
    %p227 = pneg %p221
    %p228 = scmp.eq.s32.totalorder %s18, 1
    %p229 = por %p227, %p228
    %p230 = scmp.ne.s32.totalorder %s222, %s225
    %p231 = scmp.eq.s32.totalorder %s18, 0
    %p232 = por %p230, %p231
    %p233 = scmp.ne.s32.totalorder %s222, %s225
    %p234 = scmp.eq.s32.totalorder %s23, 1
    %p235 = por %p233, %p234
    %p236 = scmp.ne.s32.totalorder %s225, %s226
    %p237 = scmp.eq.s32.totalorder %s23, 0
    %p238 = por %p236, %p237
    %p239 = scmp.ne.s32.totalorder %s225, %s226
    %p240 = scmp.eq.s32.totalorder %s24, 1
    %p241 = por %p239, %p240
    %p243 = scmp.ne.s32.totalorder %s226, %s242
    %p244 = scmp.eq.s32.totalorder %s24, 0
    %p245 = por %p243, %p244
    %s246 = ssub.s32 %s26, %s33
    %p247 = scmp.eq.s32.totalorder %s246, 0
    %s249 = sadd.s32 %s248, 1
    %s250 = scalar_select %p247, %s248, %s249
    %p253 = pneg %p247
    %p254 = scmp.eq.s32.totalorder %s18, 1
    %p255 = por %p253, %p254
    %p256 = scmp.ne.s32.totalorder %s248, %s251
    %p257 = scmp.eq.s32.totalorder %s18, 0
    %p258 = por %p256, %p257
    %p259 = scmp.ne.s32.totalorder %s248, %s251
    %p260 = scmp.eq.s32.totalorder %s23, 1
    %p261 = por %p259, %p260
    %p262 = scmp.ne.s32.totalorder %s251, %s252
    %p263 = scmp.eq.s32.totalorder %s23, 0
    %p264 = por %p262, %p263
    %p265 = scmp.ne.s32.totalorder %s251, %s252
    %p266 = scmp.eq.s32.totalorder %s24, 1
    %p267 = por %p265, %p266
    %p269 = scmp.ne.s32.totalorder %s252, %s268
    %p270 = scmp.eq.s32.totalorder %s24, 0
    %p271 = por %p269, %p270
    %s272 = ssub.s32 %s26, %s33
    %p273 = scmp.eq.s32.totalorder %s272, 0
    %s275 = sadd.s32 %s274, 1
    %s276 = scalar_select %p273, %s274, %s275
    %p279 = pneg %p273
    %p280 = scmp.eq.s32.totalorder %s18, 1
    %p281 = por %p279, %p280
    %p282 = scmp.ne.s32.totalorder %s274, %s277
    %p283 = scmp.eq.s32.totalorder %s18, 0
    %p284 = por %p282, %p283
    %p285 = scmp.ne.s32.totalorder %s274, %s277
    %p286 = scmp.eq.s32.totalorder %s23, 1
    %p287 = por %p285, %p286
    %p288 = scmp.ne.s32.totalorder %s277, %s278
    %p289 = scmp.eq.s32.totalorder %s23, 0
    %p290 = por %p288, %p289
    %p291 = scmp.ne.s32.totalorder %s277, %s278
    %p292 = scmp.eq.s32.totalorder %s24, 1
    %p293 = por %p291, %p292
    %p295 = scmp.ne.s32.totalorder %s278, %s294
    %p296 = scmp.eq.s32.totalorder %s24, 0
    %p297 = por %p295, %p296
    %s298 = ssub.s32 %s26, %s33
    %p299 = scmp.eq.s32.totalorder %s298, 0
    %s301 = sadd.s32 %s300, 1
    %s302 = scalar_select %p299, %s300, %s301
    %p305 = pneg %p299
    %p306 = scmp.eq.s32.totalorder %s18, 1
    %p307 = por %p305, %p306
    %p308 = scmp.ne.s32.totalorder %s300, %s303
    %p309 = scmp.eq.s32.totalorder %s18, 0
    %p310 = por %p308, %p309
    %p311 = scmp.ne.s32.totalorder %s300, %s303
    %p312 = scmp.eq.s32.totalorder %s23, 1
    %p313 = por %p311, %p312
    %p314 = scmp.ne.s32.totalorder %s303, %s304
    %p315 = scmp.eq.s32.totalorder %s23, 0
    %p316 = por %p314, %p315
    %p317 = scmp.ne.s32.totalorder %s303, %s304
    %p318 = scmp.eq.s32.totalorder %s24, 1
    %p319 = por %p317, %p318
    %p321 = scmp.ne.s32.totalorder %s304, %s320
    %p322 = scmp.eq.s32.totalorder %s24, 0
    %p323 = por %p321, %p322
    %s324 = ssub.s32 %s26, %s33
    %p325 = scmp.eq.s32.totalorder %s324, 0
    %s327 = sadd.s32 %s326, 1
    %s328 = scalar_select %p325, %s326, %s327
    %p331 = pneg %p325
    %p332 = scmp.eq.s32.totalorder %s18, 1
    %p333 = por %p331, %p332
    %p334 = scmp.ne.s32.totalorder %s326, %s329
    %p335 = scmp.eq.s32.totalorder %s18, 0
    %p336 = por %p334, %p335
    %p337 = scmp.ne.s32.totalorder %s326, %s329
    %p338 = scmp.eq.s32.totalorder %s23, 1
    %p339 = por %p337, %p338
    %p340 = scmp.ne.s32.totalorder %s329, %s330
    %p341 = scmp.eq.s32.totalorder %s23, 0
    %p342 = por %p340, %p341
    %p343 = scmp.ne.s32.totalorder %s329, %s330
    %p344 = scmp.eq.s32.totalorder %s24, 1
    %p345 = por %p343, %p344
    %p347 = scmp.ne.s32.totalorder %s330, %s346
    %p348 = scmp.eq.s32.totalorder %s24, 0
    %p349 = por %p347, %p348
    %s350 = ssub.s32 %s25, %s37
    %p351 = scmp.eq.s32.totalorder %s350, 0
    %s353 = sadd.s32 %s352, 1
    %s354 = scalar_select %p351, %s352, %s353
    %p357 = pneg %p351
    %p358 = scmp.eq.s32.totalorder %s18, 1
    %p359 = por %p357, %p358
    %p360 = scmp.ne.s32.totalorder %s352, %s355
    %p361 = scmp.eq.s32.totalorder %s18, 0
    %p362 = por %p360, %p361
    %p363 = scmp.ne.s32.totalorder %s352, %s355
    %p364 = scmp.eq.s32.totalorder %s23, 1
    %p365 = por %p363, %p364
    %p366 = scmp.ne.s32.totalorder %s355, %s356
    %p367 = scmp.eq.s32.totalorder %s23, 0
    %p368 = por %p366, %p367
    %p369 = scmp.ne.s32.totalorder %s355, %s356
    %p370 = scmp.eq.s32.totalorder %s24, 1
    %p371 = por %p369, %p370
    %p373 = scmp.ne.s32.totalorder %s356, %s372
    %p374 = scmp.eq.s32.totalorder %s24, 0
    %p375 = por %p373, %p374
    %p376 = scmp.le.s32.totalorder 1, %s18
    %p377 = scmp.lt.s32.totalorder %s18, 3
    %p378 = pnand %p376, %p377
    %p379 = pneg %p378
    // Predicated region
    $region9: #{forward.2} parent=5 // pred_check
      _
    $region10: #{forward.2} parent=5 // pred_check_branch
      %381 = sbr.rel (%p378) target = $region12
    $region11: #{forward.2} parent=5 // pred_region
      %s382 = ssub.s32 %s18, 1
      // Predicated region
      $region13: #{forward.2} parent=11 // pred_check
        %p383 = pneg %p56
      $region14: #{forward.2} parent=11 // pred_check_branch
        %385 = sbr.rel (%p383) target = $region16
      $region15: #{forward.2} parent=11 // pred_region
        %s386 = smul.u32 2, %s27
        %p387 = scmp.lt.s32.totalorder %s386, 1
        %s388 = scalar_select %p387, %s386, 1
        %s389 = smul.addr %s388, 8
        %s390 = scalar_lea.vmem %s0, %s389
        %s391 = smul.u32 2, %s27
      $region16: #{forward.2} parent=11 // pred_fallthru
        _
    $region12: #{forward.2} parent=5 // pred_fallthru
      _
    %p392 = scmp.lt.s32.totalorder %s18, 2
    // Predicated region
    $region17: #{forward.2} parent=5 // pred_check
      %p393 = pneg %p392
    $region18: #{forward.2} parent=5 // pred_check_branch
      %395 = sbr.rel (%p393) target = $region20
    $region19: #{forward.2} parent=5 // pred_region
      // Predicated region
      $region21: #{forward.2} parent=19 // pred_check
        %p396 = pneg %p76
      $region22: #{forward.2} parent=19 // pred_check_branch
        %398 = sbr.rel (%p396) target = $region24
      $region23: #{forward.2} parent=19 // pred_region
        %p399 = scmp.lt.s32.totalorder %s26, 1
        %s400 = scalar_select %p399, %s26, 1
        %s401 = scalar_lea.vmem %s1, %s400
      $region24: #{forward.2} parent=19 // pred_fallthru
        _
      // Predicated region
      $region25: #{forward.2} parent=19 // pred_check
        %p402 = pneg %p102
      $region26: #{forward.2} parent=19 // pred_check_branch
        %404 = sbr.rel (%p402) target = $region28
      $region27: #{forward.2} parent=19 // pred_region
        %p405 = scmp.lt.s32.totalorder %s26, 1
        %s406 = scalar_select %p405, %s26, 1
        %s407 = scalar_lea.vmem %s2, %s406
      $region28: #{forward.2} parent=19 // pred_fallthru
        _
      // Predicated region
      $region29: #{forward.2} parent=19 // pred_check
        %p408 = pneg %p128
      $region30: #{forward.2} parent=19 // pred_check_branch
        %410 = sbr.rel (%p408) target = $region32
      $region31: #{forward.2} parent=19 // pred_region
        %p411 = scmp.lt.s32.totalorder %s26, 1
        %s412 = scalar_select %p411, %s26, 1
        %s413 = smul.addr %s412, 4
        %s414 = smul.addr %s413, 4
        %s415 = scalar_lea.vmem %s3, %s414
      $region32: #{forward.2} parent=19 // pred_fallthru
        _
      // Predicated region
      $region33: #{forward.2} parent=19 // pred_check
        %p416 = pneg %p154
      $region34: #{forward.2} parent=19 // pred_check_branch
        %418 = sbr.rel (%p416) target = $region36
      $region35: #{forward.2} parent=19 // pred_region
        %p419 = scmp.lt.s32.totalorder %s26, 1
        %s420 = scalar_select %p419, %s26, 1
        %s421 = scalar_lea.vmem %s4, %s420
      $region36: #{forward.2} parent=19 // pred_fallthru
        _
      // Predicated region
      $region37: #{forward.2} parent=19 // pred_check
        %p422 = pneg %p180
      $region38: #{forward.2} parent=19 // pred_check_branch
        %424 = sbr.rel (%p422) target = $region40
      $region39: #{forward.2} parent=19 // pred_region
        %p425 = scmp.lt.s32.totalorder %s26, 1
        %s426 = scalar_select %p425, %s26, 1
        %s427 = smul.addr %s426, 4
        %s428 = smul.addr %s427, 4
        %s429 = scalar_lea.vmem %s5, %s428
      $region40: #{forward.2} parent=19 // pred_fallthru
        _
      // Predicated region
      $region41: #{forward.2} parent=19 // pred_check
        %p430 = pneg %p206
      $region42: #{forward.2} parent=19 // pred_check_branch
        %432 = sbr.rel (%p430) target = $region44
      $region43: #{forward.2} parent=19 // pred_region
        %p433 = scmp.lt.s32.totalorder %s26, 1
        %s434 = scalar_select %p433, %s26, 1
        %s435 = scalar_lea.vmem %s6, %s434
      $region44: #{forward.2} parent=19 // pred_fallthru
        _
      // Predicated region
      $region45: #{forward.2} parent=19 // pred_check
        %p436 = pneg %p232
      $region46: #{forward.2} parent=19 // pred_check_branch
        %438 = sbr.rel (%p436) target = $region48
      $region47: #{forward.2} parent=19 // pred_region
        %p439 = scmp.lt.s32.totalorder %s26, 1
        %s440 = scalar_select %p439, %s26, 1
        %s441 = scalar_lea.vmem %s7, %s440
      $region48: #{forward.2} parent=19 // pred_fallthru
        _
      // Predicated region
      $region49: #{forward.2} parent=19 // pred_check
        %p442 = pneg %p258
      $region50: #{forward.2} parent=19 // pred_check_branch
        %444 = sbr.rel (%p442) target = $region52
      $region51: #{forward.2} parent=19 // pred_region
        %p445 = scmp.lt.s32.totalorder %s26, 1
        %s446 = scalar_select %p445, %s26, 1
        %s447 = smul.addr %s446, 4
        %s448 = smul.addr %s447, 4
        %s449 = scalar_lea.vmem %s8, %s448
      $region52: #{forward.2} parent=19 // pred_fallthru
        _
      // Predicated region
      $region53: #{forward.2} parent=19 // pred_check
        %p450 = pneg %p284
      $region54: #{forward.2} parent=19 // pred_check_branch
        %452 = sbr.rel (%p450) target = $region56
      $region55: #{forward.2} parent=19 // pred_region
        %p453 = scmp.lt.s32.totalorder %s26, 1
        %s454 = scalar_select %p453, %s26, 1
        %s455 = scalar_lea.vmem %s9, %s454
      $region56: #{forward.2} parent=19 // pred_fallthru
        _
      // Predicated region
      $region57: #{forward.2} parent=19 // pred_check
        %p456 = pneg %p310
      $region58: #{forward.2} parent=19 // pred_check_branch
        %458 = sbr.rel (%p456) target = $region60
      $region59: #{forward.2} parent=19 // pred_region
        %p459 = scmp.lt.s32.totalorder %s26, 1
        %s460 = scalar_select %p459, %s26, 1
        %s461 = smul.addr %s460, 8
        %s462 = smul.addr %s461, 4
        %s463 = scalar_lea.vmem %s10, %s462
      $region60: #{forward.2} parent=19 // pred_fallthru
        _
      // Predicated region
      $region61: #{forward.2} parent=19 // pred_check
        %p464 = pneg %p336
      $region62: #{forward.2} parent=19 // pred_check_branch
        %466 = sbr.rel (%p464) target = $region64
      $region63: #{forward.2} parent=19 // pred_region
        %p467 = scmp.lt.s32.totalorder %s26, 1
        %s468 = scalar_select %p467, %s26, 1
        %s469 = scalar_lea.vmem %s11, %s468
      $region64: #{forward.2} parent=19 // pred_fallthru
        _
    $region20: #{forward.2} parent=5 // pred_fallthru
      _
    %p470 = scmp.le.s32.totalorder 1, %s18
    %p471 = scmp.lt.s32.totalorder %s18, 3
    %p472 = pnand %p470, %p471
    %p473 = pneg %p472
    // Predicated region
    $region65: #{forward.2} parent=5 // pred_check
      _
    $region66: #{forward.2} parent=5 // pred_check_branch
      %475 = sbr.rel (%p472) target = $region68
    $region67: #{forward.2} parent=5 // pred_region
      %s476 = ssub.s32 %s18, 1
      %s477 = smul.u32 2, %s27
      %p478 = scmp.lt.s32.totalorder %s477, 1
      %s479 = scalar_select %p478, %s477, 1
      %s480 = smul.addr %s479, 8
      %s481 = scalar_lea.vmem %s0, %s480
      %p482 = pneg %p56
      %p483 = pneg %p53
      %p484 = scmp.lt.s32.totalorder %s28, 1
      %s485 = scalar_select %p484, %s28, 1
      %s486 = scalar_lea.vmem %s1, %s485
      %p487 = pneg %p82
      %p488 = pneg %p79
      %p489 = scmp.lt.s32.totalorder %s28, 1
      %s490 = scalar_select %p489, %s28, 1
      %s491 = scalar_lea.vmem %s2, %s490
      %p492 = pneg %p108
      %p493 = pneg %p105
      %p494 = scmp.lt.s32.totalorder %s28, 1
      %s495 = scalar_select %p494, %s28, 1
      %s496 = smul.addr %s495, 4
      %s497 = smul.addr %s496, 4
      %s498 = scalar_lea.vmem %s3, %s497
      %p499 = pneg %p134
      %p500 = pneg %p131
      %p501 = scmp.lt.s32.totalorder %s28, 1
      %s502 = scalar_select %p501, %s28, 1
      %s503 = scalar_lea.vmem %s4, %s502
      %p504 = pneg %p160
      %p505 = pneg %p157
      %p506 = scmp.lt.s32.totalorder %s28, 1
      %s507 = scalar_select %p506, %s28, 1
      %s508 = smul.addr %s507, 4
      %s509 = smul.addr %s508, 4
      %s510 = scalar_lea.vmem %s5, %s509
      %p511 = pneg %p186
      %p512 = pneg %p183
      %p513 = scmp.lt.s32.totalorder %s28, 1
      %s514 = scalar_select %p513, %s28, 1
      %s515 = scalar_lea.vmem %s6, %s514
      %p516 = pneg %p212
      %p517 = pneg %p209
      %p518 = scmp.lt.s32.totalorder %s28, 1
      %s519 = scalar_select %p518, %s28, 1
      %s520 = scalar_lea.vmem %s7, %s519
      %p521 = pneg %p238
      %p522 = pneg %p235
      %p523 = scmp.lt.s32.totalorder %s28, 1
      %s524 = scalar_select %p523, %s28, 1
      %s525 = smul.addr %s524, 4
      %s526 = smul.addr %s525, 4
      %s527 = scalar_lea.vmem %s8, %s526
      %p528 = pneg %p264
      %p529 = pneg %p261
      %p530 = scmp.lt.s32.totalorder %s28, 1
      %s531 = scalar_select %p530, %s28, 1
      %s532 = scalar_lea.vmem %s9, %s531
      %p533 = pneg %p290
      %p534 = pneg %p287
      %p535 = scmp.lt.s32.totalorder %s28, 1
      %s536 = scalar_select %p535, %s28, 1
      %s537 = smul.addr %s536, 8
      %s538 = smul.addr %s537, 4
      %s539 = scalar_lea.vmem %s10, %s538
      %p540 = pneg %p316
      %p541 = pneg %p313
      %p542 = scmp.lt.s32.totalorder %s28, 1
      %s543 = scalar_select %p542, %s28, 1
      %s544 = scalar_lea.vmem %s11, %s543
      %p545 = pneg %p342
      %p546 = pneg %p339
      %p547 = pneg %p368
      %p548 = pneg %p365
      %s549 = smul.u32 2, %s27
      %p550 = scmp.lt.s32.totalorder %s549, 1
      %s551 = scalar_select %p550, %s549, 1
      %s552 = smul.addr %s551, 8
      %s553 = scalar_lea.vmem %s12, %s552
      %s554 = smul.u32 2, %s27
      %p555 = scmp.lt.s32.totalorder %s554, 1
      %s556 = scalar_select %p555, %s554, 1
      %s557 = smul.addr %s556, 8
      %s558 = scalar_lea.vmem %s0, %s557
      %s559 = smul.u32 2, %s27
      %p560 = scmp.lt.s32.totalorder %s28, 1
      %s561 = scalar_select %p560, %s28, 1
      %s562 = scalar_lea.vmem %s1, %s561
      %p563 = scmp.lt.s32.totalorder %s28, 1
      %s564 = scalar_select %p563, %s28, 1
      %s565 = scalar_lea.vmem %s2, %s564
      %p566 = scmp.lt.s32.totalorder %s28, 1
      %s567 = scalar_select %p566, %s28, 1
      %s568 = smul.addr %s567, 4
      %s569 = smul.addr %s568, 4
      %s570 = scalar_lea.vmem %s3, %s569
      %p571 = scmp.lt.s32.totalorder %s28, 1
      %s572 = scalar_select %p571, %s28, 1
      %s573 = scalar_lea.vmem %s4, %s572
      %p574 = scmp.lt.s32.totalorder %s28, 1
      %s575 = scalar_select %p574, %s28, 1
      %s576 = smul.addr %s575, 4
      %s577 = smul.addr %s576, 4
      %s578 = scalar_lea.vmem %s5, %s577
      %p579 = scmp.lt.s32.totalorder %s28, 1
      %s580 = scalar_select %p579, %s28, 1
      %s581 = scalar_lea.vmem %s6, %s580
      %p582 = scmp.lt.s32.totalorder %s28, 1
      %s583 = scalar_select %p582, %s28, 1
      %s584 = scalar_lea.vmem %s7, %s583
      %p585 = scmp.lt.s32.totalorder %s28, 1
      %s586 = scalar_select %p585, %s28, 1
      %s587 = smul.addr %s586, 4
      %s588 = smul.addr %s587, 4
      %s589 = scalar_lea.vmem %s8, %s588
      %p590 = scmp.lt.s32.totalorder %s28, 1
      %s591 = scalar_select %p590, %s28, 1
      %s592 = scalar_lea.vmem %s9, %s591
      %p593 = scmp.lt.s32.totalorder %s28, 1
      %s594 = scalar_select %p593, %s28, 1
      %s595 = smul.addr %s594, 8
      %s596 = smul.addr %s595, 4
      %s597 = scalar_lea.vmem %s10, %s596
      %p598 = scmp.lt.s32.totalorder %s28, 1
      %s599 = scalar_select %p598, %s28, 1
      %s600 = scalar_lea.vmem %s11, %s599
      %s601 = smul.u32 2, %s27
      %p602 = scmp.lt.s32.totalorder %s601, 1
      %s603 = scalar_select %p602, %s601, 1
      %s604 = smul.addr %s603, 8
      %s605 = scalar_lea.vmem %s12, %s604
      %s606 = smul.u32 2, %s27
      %p608 = scmp.eq.s32.totalorder %s28, 0
      // Predicated region
      $region69: #{forward.2} parent=67 // pred_check
        %p609 = pneg %p608
      $region70: #{forward.2} parent=67 // pred_check_branch
        %611 = sbr.rel (%p609) target = $region72
      $region71: #{forward.2} parent=67 // pred_region
        %v612 = vld [vmem:[%s558] sm:$0xff]
        %v613 = vld [vmem:[%s558 + $0x8] sm:$0xff]
        %vm614 = vcmask 261120
        %615 = vst.msk [vmem:[%s605] sm:$0xff] %vm614, %v612
        %616 = vst.msk [vmem:[%s605 + $0x8] sm:$0xff] %vm614, %v613
      $region72: #{forward.2} parent=67 // pred_fallthru
        _
      %v617 = vld [vmem:[%s605] sm:$0xff]
      %v618 = vld [vmem:[%s605 + $0x8] sm:$0xff]
      %v619 = vld [vmem:[%s562] sm:$0x1]
      %v620 = vld [vmem:[%s565] sm:$0x1]
      %vm621 = vcmask 261120
      %v622 = vsel %vm621, %v617, 0.0
      %623 = vadd.xlane.f32.xlu0 %v622
      %v624 = vpop.xlane.xlu0 %623
      %v625 = vsel %vm621, %v618, 0.0
      %626 = vadd.xlane.f32.xlu0 %v625
      %v627 = vpop.xlane.xlu0 %626
      %v628 = vrcp.pop 32.0
      %v629 = vmul.f32 32.0, %v628
      %v630 = vsub.f32 1.0, %v629
      %v631 = vmul.f32 %v628, %v630
      %v632 = vadd.f32 %v628, %v631
      %vm633 = vweird.f32 %v628
      %v634 = vsel %vm633, %v628, %v632
      %v635 = vmul.f32 %v624, %v634
      %v636 = vmul.f32 %v627, %v634
      %v637 = vsub.f32 %v617, %v635
      %v638 = vsub.f32 %v618, %v636
      %v639 = vmul.f32 %v637, %v637
      %v640 = vmul.f32 %v638, %v638
      %v641 = vsel %vm621, %v639, 0.0
      %642 = vadd.xlane.f32.xlu0 %v641
      %v643 = vpop.xlane.xlu0 %642
      %v644 = vsel %vm621, %v640, 0.0
      %645 = vadd.xlane.f32.xlu0 %v644
      %v646 = vpop.xlane.xlu0 %645
      %v647 = vmul.f32 %v643, %v634
      %v648 = vmul.f32 %v646, %v634
      %v649 = vadd.f32 %v647, 1e-05
      %v650 = vadd.f32 %v648, 1e-05
      %v651 = vrsqrt.pop %v649
      %v652 = vmul.f32 %v651, %v649
      %v653 = vmul.f32 %v652, %v651
      %v654 = vmul.f32 0.5, %v653
      %v655 = vsub.f32 1.5, %v654
      %v656 = vmul.f32 %v651, %v655
      %vm657 = vweird.f32 %v649
      %vm658 = vweird.f32 %v651
      %vm659 = vmor %vm657, %vm658
      %v660 = vsel %vm659, %v651, %v656
      %v661 = vrsqrt.pop %v650
      %v662 = vmul.f32 %v661, %v650
      %v663 = vmul.f32 %v662, %v661
      %v664 = vmul.f32 0.5, %v663
      %v665 = vsub.f32 1.5, %v664
      %v666 = vmul.f32 %v661, %v665
      %vm667 = vweird.f32 %v650
      %vm668 = vweird.f32 %v661
      %vm669 = vmor %vm667, %vm668
      %v670 = vsel %vm669, %v661, %v666
      %v671 = vmul.f32 %v637, %v660
      %v672 = vmul.f32 %v638, %v670
      %v674 = vperm.slane %v619, 0
      %v676 = vmul.f32 %v671, %v674
      %v677 = vmul.f32 %v672, %v674
      %v679 = vperm.slane %v620, 0
      %v681 = vadd.f32 %v676, %v679
      %v682 = vadd.f32 %v677, %v679
      %v683 = vpack.c.bf16 %v682, %v681
      %v684 = vld [vmem:[%s570] sm:$0xf]
      %v685 = vld [vmem:[%s570 + $0x4] sm:$0xf]
      %v686 = vld [vmem:[%s570 + $0x8] sm:$0xf]
      %v687 = vld [vmem:[%s570 + $0xc] sm:$0xf]
      %v688 = vld [vmem:[%s573] sm:$0x1]
      %v690 = vperm.slane %v688, 0
      %v696 = vunpack.c.l.b16 %v684
      %v697 = vunpack.c.l.b16 %v685
      %v698 = vunpack.c.l.b16 %v686
      %v699 = vunpack.c.l.b16 %v687
      %v700 = vpack.c.b16 %v697, %v696
      %v701 = vpack.c.b16 %v699, %v698
      %v705 = vsel %vm621, %v683, 0
      %707 = vmatpush.bf16.msra.mxu0 0
      %708 = vmatpush.bf16.msra.mxu0 0
      %709 = vmatpush.bf16.msra.mxu0 0
      %710 = vmatpush.bf16.msra.mxu0 0
      %711 = vmatpush.bf16.msra.mxu0 0
      %712 = vmatpush.bf16.msra.mxu0 0
      %713 = vmatpush.bf16.msra.mxu0 %v701
      %714 = vmatpush.bf16.msra.mxu0 %v700
      %715 = vmatmul.bf16.gmra.mxu0 %v705
      %v716 = vpop.f32.mrf.mxu0
      %v717 = vadd.f32 %v690, %v716
      %v718 = vpop.f32.mrf.mxu0
      %v719 = vadd.f32 %v690, %v718
      %720 = vdwg.mxu0
      %v721 = vpack.c.bf16 %v717, %v717
      %v722 = vpack.c.bf16 %v719, %v719
      %725 = vrot.lane.b32.xlu0 %v721, 112
      %v726 = vpop.permute.xlu0 %725
      %727 = vrot.lane.b32.xlu0 %v722, 112
      %v728 = vpop.permute.xlu0 %727
      %v729 = vunpack.c.l.b16 %v721
      %v730 = vpack.c.b16 %v729, %v729
      %731 = vrot.lane.b32.xlu0 %v730, 96
      %v732 = vpop.permute.xlu0 %731
      %vm733 = vcmask 130048
      %v735 = vsel %vm733, %v721, 0
      %v738 = vsel %vm733, %v732, 0
      %740 = vmatpush.bf16.xpose.msra.mxu0 0
      %741 = vmatpush.bf16.xpose.msra.mxu0 0
      %742 = vmatpush.bf16.xpose.msra.mxu0 0
      %743 = vmatpush.bf16.xpose.msra.mxu0 0
      %744 = vmatpush.bf16.xpose.msra.mxu0 0
      %745 = vmatpush.bf16.xpose.msra.mxu0 0
      %746 = vmatpush.bf16.xpose.msra.mxu0 0
      %747 = vmatpush.bf16.xpose.msra.mxu0 %v738
      %748 = vmatmul.bf16.gmra.mxu0 %v735
      %v749 = vpop.f32.mrf.mxu0
      %v750 = vadd.f32 0.0, %v749
      %v751 = vpop.f32.mrf.mxu0
      %752 = vdwg.mxu0
      %v753 = vunpack.c.l.b16 %v722
      %v754 = vpack.c.b16 %v753, %v753
      %755 = vrot.lane.b32.xlu0 %v754, 96
      %v756 = vpop.permute.xlu0 %755
      %v758 = vsel %vm733, %v722, 0
      %v761 = vsel %vm733, %v756, 0
      %763 = vmatpush.bf16.xpose.msra.mxu0 0
      %764 = vmatpush.bf16.xpose.msra.mxu0 0
      %765 = vmatpush.bf16.xpose.msra.mxu0 0
      %766 = vmatpush.bf16.xpose.msra.mxu0 0
      %767 = vmatpush.bf16.xpose.msra.mxu0 0
      %768 = vmatpush.bf16.xpose.msra.mxu0 0
      %769 = vmatpush.bf16.xpose.msra.mxu0 0
      %770 = vmatpush.bf16.xpose.msra.mxu0 %v761
      %771 = vmatmul.bf16.gmra.mxu0 %v758
      %v772 = vpop.f32.mrf.mxu0
      %v773 = vadd.f32 0.0, %v772
      %v774 = vpop.f32.mrf.mxu0
      %775 = vdwg.mxu0
      %v776 = vunpack.c.l.b16 %v726
      %v777 = vpack.c.b16 %v776, %v776
      %778 = vrot.lane.b32.xlu0 %v777, 96
      %v779 = vpop.permute.xlu0 %778
      %v781 = vsel %vm733, %v726, 0
      %v784 = vsel %vm733, %v779, 0
      %786 = vmatpush.bf16.xpose.msra.mxu0 0
      %787 = vmatpush.bf16.xpose.msra.mxu0 0
      %788 = vmatpush.bf16.xpose.msra.mxu0 0
      %789 = vmatpush.bf16.xpose.msra.mxu0 0
      %790 = vmatpush.bf16.xpose.msra.mxu0 0
      %791 = vmatpush.bf16.xpose.msra.mxu0 0
      %792 = vmatpush.bf16.xpose.msra.mxu0 0
      %793 = vmatpush.bf16.xpose.msra.mxu0 %v784
      %794 = vmatmul.bf16.gmra.mxu0 %v781
      %v795 = vpop.f32.mrf.mxu0
      %v796 = vadd.f32 0.0, %v795
      %v797 = vpop.f32.mrf.mxu0
      %798 = vdwg.mxu0
      %v799 = vunpack.c.l.b16 %v728
      %v800 = vpack.c.b16 %v799, %v799
      %801 = vrot.lane.b32.xlu0 %v800, 96
      %v802 = vpop.permute.xlu0 %801
      %v804 = vsel %vm733, %v728, 0
      %v807 = vsel %vm733, %v802, 0
      %809 = vmatpush.bf16.xpose.msra.mxu0 0
      %810 = vmatpush.bf16.xpose.msra.mxu0 0
      %811 = vmatpush.bf16.xpose.msra.mxu0 0
      %812 = vmatpush.bf16.xpose.msra.mxu0 0
      %813 = vmatpush.bf16.xpose.msra.mxu0 0
      %814 = vmatpush.bf16.xpose.msra.mxu0 0
      %815 = vmatpush.bf16.xpose.msra.mxu0 0
      %816 = vmatpush.bf16.xpose.msra.mxu0 %v807
      %817 = vmatmul.bf16.gmra.mxu0 %v804
      %v818 = vpop.f32.mrf.mxu0
      %v819 = vadd.f32 0.0, %v818
      %v820 = vpop.f32.mrf.mxu0
      %821 = vdwg.mxu0
      %v822 = vlaneseq
      %v823 = vshrl.u32 %v822, 7
      %v824 = vlaneseq
      %v825 = vand.u32 %v824, 127
      %vm826 = vcmp.ge.s32.totalorder %v823, %v825
      %v827 = vsel %vm826, 1, 0
      %vm828 = vcmp.eq.s32.totalorder %v827, 1
      %v829 = vsel %vm828, %v750, -1e+30
      %v830 = vsel %vm828, %v773, -1e+30
      %v831 = vsel %vm828, %v796, -1e+30
      %v832 = vsel %vm828, %v819, -1e+30
      %vm833 = vcmask 64512
      %v834 = vsel %vm833, %v829, -inf
      %835 = vmax.xlane.f32.xlu0 %v834
      %v836 = vpop.xlane.xlu0 %835
      %v837 = vsel %vm833, %v830, -inf
      %838 = vmax.xlane.f32.xlu0 %v837
      %v839 = vpop.xlane.xlu0 %838
      %v840 = vsel %vm833, %v831, -inf
      %841 = vmax.xlane.f32.xlu0 %v840
      %v842 = vpop.xlane.xlu0 %841
      %v843 = vsel %vm833, %v832, -inf
      %844 = vmax.xlane.f32.xlu0 %v843
      %v845 = vpop.xlane.xlu0 %844
      %v846 = vmax.f32 %v836, -1e+30
      %v847 = vmax.f32 %v839, -1e+30
      %v848 = vmax.f32 %v842, -1e+30
      %v849 = vmax.f32 %v845, -1e+30
      %v850 = vsub.f32 -1e+30, %v846
      %v851 = vsub.f32 -1e+30, %v847
      %v852 = vsub.f32 -1e+30, %v848
      %v853 = vsub.f32 -1e+30, %v849
      %v854 = vmul.f32 %v850, 1.442695
      %v855 = vpow.pop %v854
      %v856 = vmul.f32 %v851, 1.442695
      %v857 = vpow.pop %v856
      %v858 = vmul.f32 %v852, 1.442695
      %v859 = vpow.pop %v858
      %v860 = vmul.f32 %v853, 1.442695
      %v861 = vpow.pop %v860
      %v862 = vsub.f32 %v829, %v846
      %v863 = vsub.f32 %v830, %v847
      %v864 = vsub.f32 %v831, %v848
      %v865 = vsub.f32 %v832, %v849
      %v866 = vmul.f32 %v862, 1.442695
      %v867 = vpow.pop %v866
      %v868 = vmul.f32 %v863, 1.442695
      %v869 = vpow.pop %v868
      %v870 = vmul.f32 %v864, 1.442695
      %v871 = vpow.pop %v870
      %v872 = vmul.f32 %v865, 1.442695
      %v873 = vpow.pop %v872
      %v874 = vmul.f32 %v855, 0.0
      %v875 = vmul.f32 %v857, 0.0
      %v876 = vmul.f32 %v859, 0.0
      %v877 = vmul.f32 %v861, 0.0
      %v878 = vsel %vm833, %v867, 0.0
      %879 = vadd.xlane.f32.xlu0 %v878
      %v880 = vpop.xlane.xlu0 %879
      %v881 = vsel %vm833, %v869, 0.0
      %882 = vadd.xlane.f32.xlu0 %v881
      %v883 = vpop.xlane.xlu0 %882
      %v884 = vsel %vm833, %v871, 0.0
      %885 = vadd.xlane.f32.xlu0 %v884
      %v886 = vpop.xlane.xlu0 %885
      %v887 = vsel %vm833, %v873, 0.0
      %888 = vadd.xlane.f32.xlu0 %v887
      %v889 = vpop.xlane.xlu0 %888
      %v890 = vadd.f32 %v874, %v880
      %v891 = vadd.f32 %v875, %v883
      %v892 = vadd.f32 %v876, %v886
      %v893 = vadd.f32 %v877, %v889
      %v894 = vpack.c.bf16 %v867, %v867
      %v895 = vpack.c.bf16 %v869, %v869
      %v896 = vpack.c.bf16 %v871, %v871
      %v897 = vpack.c.bf16 %v873, %v873
      %898 = vrot.lane.b32.xlu0 %v730, 64
      %v899 = vpop.permute.xlu0 %898
      %v901 = vsel %vm833, %v894, 0
      %vm903 = vcmask 1043456
      %v905 = vsel %vm903, %v899, 0
      %907 = vmatpush.bf16.msra.mxu0 0
      %908 = vmatpush.bf16.msra.mxu0 0
      %909 = vmatpush.bf16.msra.mxu0 0
      %910 = vmatpush.bf16.msra.mxu0 0
      %911 = vmatpush.bf16.msra.mxu0 0
      %912 = vmatpush.bf16.msra.mxu0 0
      %913 = vmatpush.bf16.msra.mxu0 0
      %914 = vmatpush.bf16.msra.mxu0 %v905
      %915 = vmatmul.bf16.gmra.mxu0 %v901
      %v916 = vpop.f32.mrf.mxu0
      %v917 = vadd.f32 0.0, %v916
      %v918 = vpop.f32.mrf.mxu0
      %919 = vdwg.mxu0
      %920 = vrot.lane.b32.xlu0 %v754, 64
      %v921 = vpop.permute.xlu0 %920
      %v923 = vsel %vm833, %v895, 0
      %v926 = vsel %vm903, %v921, 0
      %928 = vmatpush.bf16.msra.mxu0 0
      %929 = vmatpush.bf16.msra.mxu0 0
      %930 = vmatpush.bf16.msra.mxu0 0
      %931 = vmatpush.bf16.msra.mxu0 0
      %932 = vmatpush.bf16.msra.mxu0 0
      %933 = vmatpush.bf16.msra.mxu0 0
      %934 = vmatpush.bf16.msra.mxu0 0
      %935 = vmatpush.bf16.msra.mxu0 %v926
      %936 = vmatmul.bf16.gmra.mxu0 %v923
      %v937 = vpop.f32.mrf.mxu0
      %v938 = vadd.f32 0.0, %v937
      %v939 = vpop.f32.mrf.mxu0
      %940 = vdwg.mxu0
      %941 = vrot.lane.b32.xlu0 %v777, 64
      %v942 = vpop.permute.xlu0 %941
      %v944 = vsel %vm833, %v896, 0
      %v947 = vsel %vm903, %v942, 0
      %949 = vmatpush.bf16.msra.mxu0 0
      %950 = vmatpush.bf16.msra.mxu0 0
      %951 = vmatpush.bf16.msra.mxu0 0
      %952 = vmatpush.bf16.msra.mxu0 0
      %953 = vmatpush.bf16.msra.mxu0 0
      %954 = vmatpush.bf16.msra.mxu0 0
      %955 = vmatpush.bf16.msra.mxu0 0
      %956 = vmatpush.bf16.msra.mxu0 %v947
      %957 = vmatmul.bf16.gmra.mxu0 %v944
      %v958 = vpop.f32.mrf.mxu0
      %v959 = vadd.f32 0.0, %v958
      %v960 = vpop.f32.mrf.mxu0
      %961 = vdwg.mxu0
      %962 = vrot.lane.b32.xlu0 %v800, 64
      %v963 = vpop.permute.xlu0 %962
      %v965 = vsel %vm833, %v897, 0
      %v968 = vsel %vm903, %v963, 0
      %970 = vmatpush.bf16.msra.mxu0 0
      %971 = vmatpush.bf16.msra.mxu0 0
      %972 = vmatpush.bf16.msra.mxu0 0
      %973 = vmatpush.bf16.msra.mxu0 0
      %974 = vmatpush.bf16.msra.mxu0 0
      %975 = vmatpush.bf16.msra.mxu0 0
      %976 = vmatpush.bf16.msra.mxu0 0
      %977 = vmatpush.bf16.msra.mxu0 %v968
      %978 = vmatmul.bf16.gmra.mxu0 %v965
      %v979 = vpop.f32.mrf.mxu0
      %v980 = vadd.f32 0.0, %v979
      %v981 = vpop.f32.mrf.mxu0
      %982 = vdwg.mxu0
      %v983 = vadd.f32 %v874, %v917
      %v984 = vadd.f32 %v875, %v938
      %v985 = vadd.f32 %v876, %v959
      %v986 = vadd.f32 %v877, %v980
      %v987 = vrcp.pop %v890
      %v988 = vrcp.pop %v891
      %v989 = vrcp.pop %v892
      %v990 = vrcp.pop %v893
      %v991 = vmul.f32 %v983, %v987
      %v992 = vmul.f32 %v984, %v988
      %v993 = vmul.f32 %v985, %v989
      %v994 = vmul.f32 %v986, %v990
      %997 = vrot.lane.b32.xlu0 %v993, 16
      %v998 = vpop.permute.xlu0 %997
      %999 = vrot.lane.b32.xlu0 %v994, 16
      %v1000 = vpop.permute.xlu0 %999
      %v1003 = vsel %vm733, %v991, %v998
      %v1004 = vsel %vm733, %v992, %v1000
      %v1005 = vpack.c.bf16 %v1004, %v1003
      %v1006 = vld [vmem:[%s578] sm:$0xf]
      %v1007 = vld [vmem:[%s578 + $0x4] sm:$0xf]
      %v1008 = vld [vmem:[%s578 + $0x8] sm:$0xf]
      %v1009 = vld [vmem:[%s578 + $0xc] sm:$0xf]
      %v1014 = vunpack.c.l.b16 %v1006
      %v1015 = vunpack.c.l.b16 %v1007
      %v1016 = vunpack.c.l.b16 %v1008
      %v1017 = vunpack.c.l.b16 %v1009
      %v1018 = vpack.c.b16 %v1015, %v1014
      %v1019 = vpack.c.b16 %v1017, %v1016
      %v1023 = vsel %vm621, %v1005, 0
      %1025 = vmatpush.bf16.msra.mxu0 0
      %1026 = vmatpush.bf16.msra.mxu0 0
      %1027 = vmatpush.bf16.msra.mxu0 0
      %1028 = vmatpush.bf16.msra.mxu0 0
      %1029 = vmatpush.bf16.msra.mxu0 0
      %1030 = vmatpush.bf16.msra.mxu0 0
      %1031 = vmatpush.bf16.msra.mxu0 %v1019
      %1032 = vmatpush.bf16.msra.mxu0 %v1018
      %1033 = vmatmul.bf16.gmra.mxu0 %v1023
      %v1034 = vpop.f32.mrf.mxu0
      %v1035 = vadd.f32 0.0, %v1034
      %v1036 = vpop.f32.mrf.mxu0
      %v1037 = vadd.f32 0.0, %v1036
      %1038 = vdwg.mxu0
      %v1039 = vadd.f32 %v617, %v1035
      %v1040 = vadd.f32 %v618, %v1037
      %v1041 = vld [vmem:[%s581] sm:$0x1]
      %v1042 = vld [vmem:[%s584] sm:$0x1]
      %v1043 = vsel %vm621, %v1039, 0.0
      %1044 = vadd.xlane.f32.xlu0 %v1043
      %v1045 = vpop.xlane.xlu0 %1044
      %v1046 = vsel %vm621, %v1040, 0.0
      %1047 = vadd.xlane.f32.xlu0 %v1046
      %v1048 = vpop.xlane.xlu0 %1047
      %v1049 = vmul.f32 %v1045, %v634
      %v1050 = vmul.f32 %v1048, %v634
      %v1051 = vsub.f32 %v1039, %v1049
      %v1052 = vsub.f32 %v1040, %v1050
      %v1053 = vmul.f32 %v1051, %v1051
      %v1054 = vmul.f32 %v1052, %v1052
      %v1055 = vsel %vm621, %v1053, 0.0
      %1056 = vadd.xlane.f32.xlu0 %v1055
      %v1057 = vpop.xlane.xlu0 %1056
      %v1058 = vsel %vm621, %v1054, 0.0
      %1059 = vadd.xlane.f32.xlu0 %v1058
      %v1060 = vpop.xlane.xlu0 %1059
      %v1061 = vmul.f32 %v1057, %v634
      %v1062 = vmul.f32 %v1060, %v634
      %v1063 = vadd.f32 %v1061, 1e-05
      %v1064 = vadd.f32 %v1062, 1e-05
      %v1065 = vrsqrt.pop %v1063
      %v1066 = vmul.f32 %v1065, %v1063
      %v1067 = vmul.f32 %v1066, %v1065
      %v1068 = vmul.f32 0.5, %v1067
      %v1069 = vsub.f32 1.5, %v1068
      %v1070 = vmul.f32 %v1065, %v1069
      %vm1071 = vweird.f32 %v1063
      %vm1072 = vweird.f32 %v1065
      %vm1073 = vmor %vm1071, %vm1072
      %v1074 = vsel %vm1073, %v1065, %v1070
      %v1075 = vrsqrt.pop %v1064
      %v1076 = vmul.f32 %v1075, %v1064
      %v1077 = vmul.f32 %v1076, %v1075
      %v1078 = vmul.f32 0.5, %v1077
      %v1079 = vsub.f32 1.5, %v1078
      %v1080 = vmul.f32 %v1075, %v1079
      %vm1081 = vweird.f32 %v1064
      %vm1082 = vweird.f32 %v1075
      %vm1083 = vmor %vm1081, %vm1082
      %v1084 = vsel %vm1083, %v1075, %v1080
      %v1085 = vmul.f32 %v1051, %v1074
      %v1086 = vmul.f32 %v1052, %v1084
      %v1088 = vperm.slane %v1041, 0
      %v1090 = vmul.f32 %v1085, %v1088
      %v1091 = vmul.f32 %v1086, %v1088
      %v1093 = vperm.slane %v1042, 0
      %v1095 = vadd.f32 %v1090, %v1093
      %v1096 = vadd.f32 %v1091, %v1093
      %v1097 = vpack.c.bf16 %v1096, %v1095
      %v1098 = vld [vmem:[%s589] sm:$0xf]
      %v1099 = vld [vmem:[%s589 + $0x4] sm:$0xf]
      %v1100 = vld [vmem:[%s589 + $0x8] sm:$0xf]
      %v1101 = vld [vmem:[%s589 + $0xc] sm:$0xf]
      %v1102 = vld [vmem:[%s592] sm:$0x1]
      %v1104 = vperm.slane %v1102, 0
      %v1110 = vunpack.c.l.b16 %v1098
      %v1111 = vunpack.c.l.b16 %v1099
      %v1112 = vunpack.c.l.b16 %v1100
      %v1113 = vunpack.c.l.b16 %v1101
      %v1114 = vpack.c.b16 %v1111, %v1110
      %v1115 = vpack.c.b16 %v1113, %v1112
      %v1119 = vsel %vm621, %v1097, 0
      %1121 = vmatpush.bf16.msra.mxu0 0
      %1122 = vmatpush.bf16.msra.mxu0 0
      %1123 = vmatpush.bf16.msra.mxu0 0
      %1124 = vmatpush.bf16.msra.mxu0 0
      %1125 = vmatpush.bf16.msra.mxu0 0
      %1126 = vmatpush.bf16.msra.mxu0 0
      %1127 = vmatpush.bf16.msra.mxu0 %v1115
      %1128 = vmatpush.bf16.msra.mxu0 %v1114
      %1129 = vmatmul.bf16.gmra.mxu0 %v1119
      %v1130 = vpop.f32.mrf.mxu0
      %v1131 = vadd.f32 %v1104, %v1130
      %v1132 = vpop.f32.mrf.mxu0
      %v1133 = vadd.f32 %v1104, %v1132
      %1134 = vdwg.mxu0
      %v1135 = vmax.f32 %v1131, 0.0
      %v1136 = vmax.f32 %v1133, 0.0
      %v1137 = vpack.c.bf16 %v1136, %v1135
      %v1138 = vld [vmem:[%s597] sm:$0xf]
      %v1139 = vld [vmem:[%s597 + $0x4] sm:$0xf]
      %v1140 = vld [vmem:[%s597 + $0x8] sm:$0xf]
      %v1141 = vld [vmem:[%s597 + $0xc] sm:$0xf]
      %v1142 = vld [vmem:[%s597 + $0x10] sm:$0xf]
      %v1143 = vld [vmem:[%s597 + $0x14] sm:$0xf]
      %v1144 = vld [vmem:[%s597 + $0x18] sm:$0xf]
      %v1145 = vld [vmem:[%s597 + $0x1c] sm:$0xf]
      %v1146 = vld [vmem:[%s600] sm:$0x1]
      %v1148 = vperm.slane %v1146, 0
      %v1158 = vunpack.c.l.b16 %v1138
      %v1159 = vunpack.c.l.b16 %v1139
      %v1160 = vunpack.c.l.b16 %v1140
      %v1161 = vunpack.c.l.b16 %v1141
      %v1162 = vunpack.c.l.b16 %v1142
      %v1163 = vunpack.c.l.b16 %v1143
      %v1164 = vunpack.c.l.b16 %v1144
      %v1165 = vunpack.c.l.b16 %v1145
      %v1166 = vpack.c.b16 %v1159, %v1158
      %v1167 = vpack.c.b16 %v1161, %v1160
      %v1168 = vpack.c.b16 %v1163, %v1162
      %v1169 = vpack.c.b16 %v1165, %v1164
      %vm1174 = vcmask 523264
      %v1176 = vsel %vm1174, %v1137, 0
      %1178 = vmatpush.bf16.msra.mxu0 0
      %1179 = vmatpush.bf16.msra.mxu0 0
      %1180 = vmatpush.bf16.msra.mxu0 0
      %1181 = vmatpush.bf16.msra.mxu0 0
      %1182 = vmatpush.bf16.msra.mxu0 %v1169
      %1183 = vmatpush.bf16.msra.mxu0 %v1168
      %1184 = vmatpush.bf16.msra.mxu0 %v1167
      %1185 = vmatpush.bf16.msra.mxu0 %v1166
      %1186 = vmatmul.bf16.gmra.mxu0 %v1176
      %v1187 = vpop.f32.mrf.mxu0
      %v1188 = vadd.f32 %v1148, %v1187
      %v1189 = vpop.f32.mrf.mxu0
      %v1190 = vadd.f32 %v1148, %v1189
      %1191 = vdwg.mxu0
      %v1192 = vadd.f32 %v1039, %v1188
      %v1193 = vadd.f32 %v1040, %v1190
      %1194 = vst.msk [vmem:[%s605] sm:$0xff] %vm621, %v1192
      %1195 = vst.msk [vmem:[%s605 + $0x8] sm:$0xff] %vm621, %v1193
      %s1196 = smul.u32 2, %s27
      %p1197 = scmp.lt.s32.totalorder %s1196, 1
      %s1198 = scalar_select %p1197, %s1196, 1
      %s1199 = smul.addr %s1198, 8
      %s1200 = scalar_lea.vmem %s12, %s1199
      // Predicated region
      $region73: #{forward.2} parent=67 // pred_check
        %p1201 = pneg %p365
      $region74: #{forward.2} parent=67 // pred_check_branch
        %1203 = sbr.rel (%p1201) target = $region76
      $region75: #{forward.2} parent=67 // pred_region
        %s1204 = smul.u32 2, %s27
      $region76: #{forward.2} parent=67 // pred_fallthru
        _
      // Predicated region
      $region77: #{forward.2} parent=67 // pred_check
        %p1205 = pneg %p365
      $region78: #{forward.2} parent=67 // pred_check_branch
        %1207 = sbr.rel (%p1205) target = $region80
      $region79: #{forward.2} parent=67 // pred_region
        %s1208 = smul.u32 2, %s27
        %p1209 = scmp.lt.s32.totalorder %s1208, 1
        %s1210 = scalar_select %p1209, %s1208, 1
        %s1211 = smul.addr %s1210, 8
        %s1212 = scalar_lea.vmem %s12, %s1211
      $region80: #{forward.2} parent=67 // pred_fallthru
        _
    $region68: #{forward.2} parent=5 // pred_fallthru
      _
    %p1213 = scmp.le.s32.totalorder 2, %s18
    // Predicated region
    $region81: #{forward.2} parent=5 // pred_check
      %p1214 = pneg %p1213
    $region82: #{forward.2} parent=5 // pred_check_branch
      %1216 = sbr.rel (%p1214) target = $region84
    $region83: #{forward.2} parent=5 // pred_region
      %s1217 = ssub.s32 %s18, 2
    $region84: #{forward.2} parent=5 // pred_fallthru
      _
  $region6: #{forward.2} parent=0 // loop_footer
    %s22 = sadd.s32 1, %s18
  $region7: #{forward.2} parent=0 // loop_footer_branch
    %17 = sbr.rel target = $region3
  $region8: #{forward.2} parent=0 // loop_exit
    _

</llo_original>
